<compile_context>
chip_gen: v7x
topology: tpu7x:2x2x1
jax: 0.10.0
libtpu: 0.0.40
codegen_flags: <defaults>
</compile_context>

<pallas_src>
import math

import jax
import jax.numpy as jnp
import numpy as np
from jax.experimental import pallas as pl
from jax.experimental.pallas import tpu as pltpu

# ----------------------------- synthetic config ------------------------------
HID = 32            # config.high_reso_cross_hid_size
HEADS = 4           # config.high_reso_cross_num_att_heads
HEAD_DIM = HID // HEADS
LN_EPS = 1e-6       # config.layer_norm_eps   (ffn_ln)
DEFAULT_EPS = 1e-5  # nn.LayerNorm default    (norm1, normk, norm2)


def _ffn_hidden_size(in_features: int) -> int:
    f = int(2 * 4 * in_features / 3)
    multiple_of = 256
    return multiple_of * ((f + multiple_of - 1) // multiple_of)


FFN = _ffn_hidden_size(HID)   # = 256 for HID=32


# --------------------------------- kernel ------------------------------------
def _ln_affine(x, gamma, beta, eps):
    mu = jnp.mean(x, axis=-1, keepdims=True)
    xc = x - mu
    var = jnp.mean(xc * xc, axis=-1, keepdims=True)
    return xc * jax.lax.rsqrt(var + eps) * gamma + beta


def _ln_noaffine(x, eps):
    mu = jnp.mean(x, axis=-1, keepdims=True)
    xc = x - mu
    var = jnp.mean(xc * xc, axis=-1, keepdims=True)
    return xc * jax.lax.rsqrt(var + eps)


def _cross_attn_layer_kernel(
    hs_ref,      # (tb*Sq, C)
    enc_ref,     # (tb*Sk, C)
    vecc_ref,    # (8, C)   rows: g1, b1, gk, bk, bo, bw2'  (+2 pad)
    wqkv_ref,    # (C, 3C)  fused [wq | wk | wv]
    bqkv_ref,    # (1, 3C)
    wo_ref,      # (C, C)
    w13_ref,     # (C, 2F)  norm2-affine folded in
    b13_ref,     # (1, 2F)  folded bias
    w2_ref,      # (F, C)   ffn_ln-affine folded in
    bd_ref,      # (H*tb*Sk, C)        per-head channel mask (block diagonal)
    seg_ref,     # (H*tb*Sk, H*tb*Sk)  same-(head,batch)-segment sum matrix
    amask_ref,   # (tb*Sq, H*tb*Sk)    0 / -1e30 cross-batch additive mask
    out_ref,     # (tb*Sq, C)
):
    nq, C = hs_ref.shape
    F = w2_ref.shape[0]
    f32 = jnp.float32

    vecc = vecc_ref[...]
    g1, b1 = vecc[0:1, :], vecc[1:2, :]
    gk, bk = vecc[2:3, :], vecc[3:4, :]
    bo, bw2 = vecc[4:5, :], vecc[5:6, :]

    # norm1 / normk (affine kept: hn is also the residual stream).
    hn = _ln_affine(hs_ref[...], g1, b1, DEFAULT_EPS)    # (tb*Sq, C)
    en = _ln_affine(enc_ref[...], gk, bk, DEFAULT_EPS)   # (tb*Sk, C)

    # Single fused QKV projection over both streams.
    hne = jnp.concatenate([hn, en], axis=0)              # (tb*(Sq+Sk), C)
    qkv = jnp.dot(hne, wqkv_ref[...], preferred_element_type=f32) + bqkv_ref[...]
    q = qkv[:nq, :C]          # (tb*Sq, C)
    k = qkv[nq:, C:2 * C]     # (tb*Sk, C)
    v = qkv[nq:, 2 * C:]      # (tb*Sk, C)

    # Batch-folded block-diagonal multi-head attention (one set of matmuls).
    bd = bd_ref[...]
    k_bd = jnp.concatenate([k] * HEADS, axis=0) * bd     # (H*tb*Sk, C)
    v_bd = jnp.concatenate([v] * HEADS, axis=0) * bd     # (H*tb*Sk, C)

    scale = 1.0 / math.sqrt(HEAD_DIM)
    s = jax.lax.dot_general(q, k_bd, (((1,), (1,)), ((), ())),
                            preferred_element_type=f32)  # (tb*Sq, H*tb*Sk)
    s = s * scale + amask_ref[...]                       # kill cross-batch cols
    # Row-global max shift: exact for per-(head,batch) softmax (per-row const
    # cancels in the segment normalization).
    # TODO(synk): switch to per-segment max if head score ranges ever differ
    # by ~80+ (fp32 exp underflow); the clamp below only prevents NaN.
    s = s - jnp.max(s, axis=-1, keepdims=True)
    e = jnp.exp(s)
    denom = jnp.dot(e, seg_ref[...], preferred_element_type=f32)
    denom = jnp.maximum(denom, 1e-30)
    p = e / denom                                        # exact reciprocal
    attn = jnp.dot(p, v_bd, preferred_element_type=f32)  # (tb*Sq, C)

    # UlusageDocDetVisualCrossOutput: residual is the *normalized* query stream
    x = hn + jnp.dot(attn, wo_ref[...], preferred_element_type=f32) + bo

    # SwiGLU MLP; norm2/ffn_ln affines are folded into w13/w2 host-side.
    xn = _ln_noaffine(x, DEFAULT_EPS)
    h13 = jnp.dot(xn, w13_ref[...], preferred_element_type=f32) + b13_ref[...]
    h1 = h13[:, :F]
    h3 = h13[:, F:]
    hm = h1 * jax.nn.sigmoid(h1) * h3
    hm = _ln_noaffine(hm, LN_EPS)
    out = x + jnp.dot(hm, w2_ref[...], preferred_element_type=f32) + bw2

    out_ref[...] = out.astype(out_ref.dtype)


# -------------------------------- wrapper -------------------------------------
def _pack_params(p):
    wqkv = jnp.concatenate([p["wq"], p["wk"], p["wv"]], axis=1)      # (C, 3C)
    bqkv = jnp.concatenate([p["bq"], p["bkp"], p["bv"]], axis=1)     # (1, 3C)
    # Fold norm2 affine into w1/w3:  norm2(x)@w + bw = nrm(x)@(g2*w) + (b2@w + bw)
    w13 = jnp.concatenate([p["w1"], p["w3"]], axis=1)                # (C, 2F)
    b13 = jnp.concatenate([p["bw1"], p["bw3"]], axis=1)              # (1, 2F)
    w13p = p["g2"].reshape(-1, 1) * w13
    b13p = p["b2"] @ w13 + b13
    # Fold ffn_ln affine into w2.
    w2p = p["gln"].reshape(-1, 1) * p["w2"]                          # (F, C)
    bw2p = p["bln"] @ p["w2"] + p["bw2"]                             # (1, C)
    vecc = jnp.concatenate(
        [p["g1"], p["b1"], p["gk"], p["bk"], p["bo"], bw2p,
         jnp.zeros((2, HID), jnp.float32)], axis=0)                  # (8, C)
    return vecc, wqkv, bqkv, p["wo"], w13p, b13p, w2p


def _make_attn_masks(tb, Sq, Sk, heads, head_dim, C):
    """Host-precomputed constant masks for the batch-folded attention.

    Column ordering of the folded key/value axis is (head, batch, key-pos):
    c = h*(tb*Sk) + t*Sk + j   (matches jnp.concatenate([k]*HEADS, axis=0)).
    """
    hts = heads * tb * Sk
    col = np.arange(hts)
    col_h = col // (tb * Sk)
    col_t = (col // Sk) % tb
    ch = np.arange(C)
    bd_mask = (col_h[:, None] == (ch[None, :] // head_dim)).astype(np.float32)
    same_seg = (col_h[:, None] == col_h[None, :]) & (col_t[:, None] == col_t[None, :])
    seg_sum = same_seg.astype(np.float32)
    row_t = np.arange(tb * Sq) // Sq
    add_mask = np.where(row_t[:, None] == col_t[None, :], 0.0, -1e30).astype(np.float32)
    return jnp.asarray(bd_mask), jnp.asarray(seg_sum), jnp.asarray(add_mask)


def cross_attention_layer(hidden_states, encoder_hidden_states, params, tb=None):
    B, Sq, C = hidden_states.shape
    _, Sk, _ = encoder_hidden_states.shape

    if tb is None:
        # Cap tb (the folded score matrix grows ~tb^2).  Prefer exactly two
        # "parallel" grid steps so both v7x TensorCores get work; on 1-TC
        # chips the extra step only costs ~0.35us.
        cap = 4
        if B % 2 == 0 and 1 <= B // 2 <= cap:
            tb = B // 2
        else:
            tb = max(d for d in range(1, min(cap, B) + 1) if B % d == 0)
    assert B % tb == 0, "batch must be divisible by tb"
    grid = (B // tb,)

    vecc, wqkv, bqkv, wo, w13p, b13p, w2p = _pack_params(params)
    bd_mask, seg_sum, add_mask = _make_attn_masks(tb, Sq, Sk, HEADS, HEAD_DIM, C)

    # Free metadata reshapes to 2D row-blocked layouts.
    hs2d = hidden_states.reshape(B * Sq, C)
    enc2d = encoder_hidden_states.reshape(B * Sk, C)

    def resident(arr):   # constant index_map -> stays resident across steps
        return pl.BlockSpec(arr.shape, lambda b: (0, 0))

    in_specs = [
        pl.BlockSpec((tb * Sq, C), lambda b: (b, 0)),
        pl.BlockSpec((tb * Sk, C), lambda b: (b, 0)),
        resident(vecc), resident(wqkv), resident(bqkv), resident(wo),
        resident(w13p), resident(b13p), resident(w2p),
        resident(bd_mask), resident(seg_sum), resident(add_mask),
    ]
    out_spec = pl.BlockSpec((tb * Sq, C), lambda b: (b, 0))

    out = pl.pallas_call(
        _cross_attn_layer_kernel,
        out_shape=jax.ShapeDtypeStruct((B * Sq, C), jnp.float32),
        grid_spec=pltpu.PrefetchScalarGridSpec(
            num_scalar_prefetch=0,
            grid=grid,
            in_specs=in_specs,
            out_specs=out_spec,
        ),
        compiler_params=pltpu.CompilerParams(
            dimension_semantics=("parallel",)),
    )(hs2d, enc2d, vecc, wqkv, bqkv, wo, w13p, b13p, w2p,
      bd_mask, seg_sum, add_mask)

    return out.reshape(B, Sq, C)


# --------------------------- pure-JAX reference --------------------------------
def reference(hidden_states, encoder_hidden_states, p):
    def ln(x, g, b, eps):
        mu = x.mean(-1, keepdims=True)
        var = ((x - mu) ** 2).mean(-1, keepdims=True)
        return (x - mu) / jnp.sqrt(var + eps) * g + b

    hn = ln(hidden_states, p["g1"], p["b1"], DEFAULT_EPS)
    en = ln(encoder_hidden_states, p["gk"], p["bk"], DEFAULT_EPS)
    q = hn @ p["wq"] + p["bq"]
    k = en @ p["wk"] + p["bkp"]
    v = en @ p["wv"] + p["bv"]
    B, Sq, C = q.shape
    Sk = k.shape[1]
    qh = q.reshape(B, Sq, HEADS, HEAD_DIM)
    kh = k.reshape(B, Sk, HEADS, HEAD_DIM)
    vh = v.reshape(B, Sk, HEADS, HEAD_DIM)
    s = jnp.einsum("bqhd,bkhd->bhqk", qh, kh) / math.sqrt(HEAD_DIM)
    pa = jax.nn.softmax(s, axis=-1)
    ctx = jnp.einsum("bhqk,bkhd->bqhd", pa, vh).reshape(B, Sq, C)
    x = hn + ctx @ p["wo"] + p["bo"]
    xn = ln(x, p["g2"], p["b2"], DEFAULT_EPS)
    h = jax.nn.silu(xn @ p["w1"] + p["bw1"]) * (xn @ p["w3"] + p["bw3"])
    h = ln(h, p["gln"], p["bln"], LN_EPS)
    return x + h @ p["w2"] + p["bw2"]


# ----------------------------- param construction ------------------------------
def make_params(key):
    # NOTE: the PyTorch module zero-inits projection/MLP biases and LayerNorms
    # default to (1, 0).  We use non-trivial values here so the test actually
    # exercises the bias packing and the host-side affine folding.
    ks = jax.random.split(key, 22)

    def w(k, shape, scale=0.05):
        return jax.random.normal(k, shape, jnp.float32) * scale

    def gamma(k, n):
        return 1.0 + w(k, (1, n), 0.1)

    def beta(k, n):
        return w(k, (1, n), 0.05)

    return {
        "g1": gamma(ks[0], HID), "b1": beta(ks[1], HID),
        "gk": gamma(ks[2], HID), "bk": beta(ks[3], HID),
        "g2": gamma(ks[4], HID), "b2": beta(ks[5], HID),
        "gln": gamma(ks[6], FFN), "bln": beta(ks[7], FFN),
        "wq": w(ks[8], (HID, HID)), "bq": beta(ks[9], HID),
        "wk": w(ks[10], (HID, HID)), "bkp": beta(ks[11], HID),
        "wv": w(ks[12], (HID, HID)), "bv": beta(ks[13], HID),
        "wo": w(ks[14], (HID, HID)), "bo": beta(ks[15], HID),
        "w1": w(ks[16], (HID, FFN)), "bw1": beta(ks[17], FFN),
        "w3": w(ks[18], (HID, FFN)), "bw3": beta(ks[19], FFN),
        "w2": w(ks[20], (FFN, HID)), "bw2": beta(ks[21], HID),
    }


# ----------------------------------- main ---------------------------------------
if __name__ == "__main__":
    key = jax.random.PRNGKey(0)
    k_hs, k_enc, k_par, k_hs2, k_enc2 = jax.random.split(key, 5)

    params = make_params(k_par)

    # Case 1: B=2 -> tb=1, grid=(2,) (one step per v7x TensorCore).
    B, Sq, Sk = 2, 8, 16
    hidden_states = jax.random.normal(k_hs, (B, Sq, HID), jnp.float32)
    encoder_hidden_states = jax.random.normal(k_enc, (B, Sk, HID), jnp.float32)
    out = jax.block_until_ready(
        cross_attention_layer(hidden_states, encoder_hidden_states, params))
    ref = jax.block_until_ready(
        reference(hidden_states, encoder_hidden_states, params))
    # Tolerance covers MXU default-precision matmuls vs the XLA reference.
    np.testing.assert_allclose(np.asarray(out), np.asarray(ref),
                               rtol=2e-3, atol=2e-3)

    # Case 2: B=4 -> tb=2 (batch-folded attention over 2 elems), grid=(2,).
    B2 = 4
    hs2 = jax.random.normal(k_hs2, (B2, Sq, HID), jnp.float32)
    enc2 = jax.random.normal(k_enc2, (B2, Sk, HID), jnp.float32)
    out2 = jax.block_until_ready(cross_attention_layer(hs2, enc2, params))
    ref2 = jax.block_until_ready(reference(hs2, enc2, params))
    np.testing.assert_allclose(np.asarray(out2), np.asarray(ref2),
                               rtol=2e-3, atol=2e-3)

    print("KERNEL_OK")
</pallas_src>

<mosaic_0001>
module attributes {stable_mosaic.version = 11 : i64} {
  func.func @_cross_attn_layer_kernel(%arg0: i32, %arg1: memref<8x32xf32, #tpu.memory_space<vmem>>, %arg2: memref<16x32xf32, #tpu.memory_space<vmem>>, %arg3: memref<8x32xf32, #tpu.memory_space<vmem>>, %arg4: memref<32x96xf32, #tpu.memory_space<vmem>>, %arg5: memref<1x96xf32, #tpu.memory_space<vmem>>, %arg6: memref<32x32xf32, #tpu.memory_space<vmem>>, %arg7: memref<32x512xf32, #tpu.memory_space<vmem>>, %arg8: memref<1x512xf32, #tpu.memory_space<vmem>>, %arg9: memref<256x32xf32, #tpu.memory_space<vmem>>, %arg10: memref<64x32xf32, #tpu.memory_space<vmem>>, %arg11: memref<64x64xf32, #tpu.memory_space<vmem>>, %arg12: memref<8x64xf32, #tpu.memory_space<vmem>>, %arg13: memref<8x32xf32, #tpu.memory_space<vmem>>) attributes {dimension_semantics = [#tpu.dimension_semantics<parallel>], iteration_bounds = array<i64: 2>, scalar_prefetch = 0 : i64, scratch_operands = 0 : i64, tpu.core_type = #tpu.core_type<tc>, window_params = [{transform_indices = @transform_0, window_bounds = array<i64: 8, 32>}, {transform_indices = @transform_1, window_bounds = array<i64: 16, 32>}, {pipeline_mode = #tpu.pipeline_mode<synchronous>, transform_indices = @transform_2, window_bounds = array<i64: 8, 32>}, {pipeline_mode = #tpu.pipeline_mode<synchronous>, transform_indices = @transform_3, window_bounds = array<i64: 32, 96>}, {pipeline_mode = #tpu.pipeline_mode<synchronous>, transform_indices = @transform_4, window_bounds = array<i64: 1, 96>}, {pipeline_mode = #tpu.pipeline_mode<synchronous>, transform_indices = @transform_5, window_bounds = array<i64: 32, 32>}, {pipeline_mode = #tpu.pipeline_mode<synchronous>, transform_indices = @transform_6, window_bounds = array<i64: 32, 512>}, {pipeline_mode = #tpu.pipeline_mode<synchronous>, transform_indices = @transform_7, window_bounds = array<i64: 1, 512>}, {pipeline_mode = #tpu.pipeline_mode<synchronous>, transform_indices = @transform_8, window_bounds = array<i64: 256, 32>}, {pipeline_mode = #tpu.pipeline_mode<synchronous>, transform_indices = @transform_9, window_bounds = array<i64: 64, 32>}, {pipeline_mode = #tpu.pipeline_mode<synchronous>, transform_indices = @transform_10, window_bounds = array<i64: 64, 64>}, {pipeline_mode = #tpu.pipeline_mode<synchronous>, transform_indices = @transform_11, window_bounds = array<i64: 8, 64>}, {transform_indices = @transform_12, window_bounds = array<i64: 8, 32>}]} {
    %c0 = arith.constant 0 : index
    %c0_0 = arith.constant 0 : index
    %0 = vector.load %arg3[%c0, %c0_0] : memref<8x32xf32, #tpu.memory_space<vmem>>, vector<8x32xf32>
    %1 = vector.extract_strided_slice %0 {offsets = [0, 0], sizes = [1, 32], strides = [1, 1]} : vector<8x32xf32> to vector<1x32xf32>
    %2 = vector.extract_strided_slice %0 {offsets = [1, 0], sizes = [1, 32], strides = [1, 1]} : vector<8x32xf32> to vector<1x32xf32>
    %3 = vector.extract_strided_slice %0 {offsets = [2, 0], sizes = [1, 32], strides = [1, 1]} : vector<8x32xf32> to vector<1x32xf32>
    %4 = vector.extract_strided_slice %0 {offsets = [3, 0], sizes = [1, 32], strides = [1, 1]} : vector<8x32xf32> to vector<1x32xf32>
    %5 = vector.extract_strided_slice %0 {offsets = [4, 0], sizes = [1, 32], strides = [1, 1]} : vector<8x32xf32> to vector<1x32xf32>
    %6 = vector.extract_strided_slice %0 {offsets = [5, 0], sizes = [1, 32], strides = [1, 1]} : vector<8x32xf32> to vector<1x32xf32>
    %c0_1 = arith.constant 0 : index
    %c0_2 = arith.constant 0 : index
    %7 = vector.load %arg1[%c0_1, %c0_2] : memref<8x32xf32, #tpu.memory_space<vmem>>, vector<8x32xf32>
    %cst = arith.constant dense<0.000000e+00> : vector<8xf32>
    %8 = vector.multi_reduction <add>, %7, %cst [1] : vector<8x32xf32> to vector<8xf32>
    %9 = vector.shape_cast %8 : vector<8xf32> to vector<8x1xf32>
    %cst_3 = arith.constant 3.200000e+01 : f32
    %10 = vector.broadcast %cst_3 : f32 to vector<8x1xf32>
    %11 = arith.divf %9, %10 : vector<8x1xf32>
    %12 = vector.broadcast %11 : vector<8x1xf32> to vector<8x32xf32>
    %13 = arith.subf %7, %12 : vector<8x32xf32>
    %14 = arith.mulf %13, %13 : vector<8x32xf32>
    %cst_4 = arith.constant dense<0.000000e+00> : vector<8xf32>
    %15 = vector.multi_reduction <add>, %14, %cst_4 [1] : vector<8x32xf32> to vector<8xf32>
    %16 = vector.shape_cast %15 : vector<8xf32> to vector<8x1xf32>
    %cst_5 = arith.constant 3.200000e+01 : f32
    %17 = vector.broadcast %cst_5 : f32 to vector<8x1xf32>
    %18 = arith.divf %16, %17 : vector<8x1xf32>
    %cst_6 = arith.constant 9.99999974E-6 : f32
    %19 = vector.broadcast %cst_6 : f32 to vector<8x1xf32>
    %20 = arith.addf %18, %19 : vector<8x1xf32>
    %21 = math.rsqrt %20 : vector<8x1xf32>
    %22 = vector.broadcast %21 : vector<8x1xf32> to vector<8x32xf32>
    %23 = arith.mulf %13, %22 : vector<8x32xf32>
    %24 = vector.broadcast %1 : vector<1x32xf32> to vector<8x32xf32>
    %25 = arith.mulf %23, %24 : vector<8x32xf32>
    %26 = vector.broadcast %2 : vector<1x32xf32> to vector<8x32xf32>
    %27 = arith.addf %25, %26 : vector<8x32xf32>
    %c0_7 = arith.constant 0 : index
    %c0_8 = arith.constant 0 : index
    %28 = vector.load %arg2[%c0_7, %c0_8] : memref<16x32xf32, #tpu.memory_space<vmem>>, vector<16x32xf32>
    %cst_9 = arith.constant dense<0.000000e+00> : vector<16xf32>
    %29 = vector.multi_reduction <add>, %28, %cst_9 [1] : vector<16x32xf32> to vector<16xf32>
    %30 = vector.shape_cast %29 : vector<16xf32> to vector<16x1xf32>
    %cst_10 = arith.constant 3.200000e+01 : f32
    %31 = vector.broadcast %cst_10 : f32 to vector<16x1xf32>
    %32 = arith.divf %30, %31 : vector<16x1xf32>
    %33 = vector.broadcast %32 : vector<16x1xf32> to vector<16x32xf32>
    %34 = arith.subf %28, %33 : vector<16x32xf32>
    %35 = arith.mulf %34, %34 : vector<16x32xf32>
    %cst_11 = arith.constant dense<0.000000e+00> : vector<16xf32>
    %36 = vector.multi_reduction <add>, %35, %cst_11 [1] : vector<16x32xf32> to vector<16xf32>
    %37 = vector.shape_cast %36 : vector<16xf32> to vector<16x1xf32>
    %cst_12 = arith.constant 3.200000e+01 : f32
    %38 = vector.broadcast %cst_12 : f32 to vector<16x1xf32>
    %39 = arith.divf %37, %38 : vector<16x1xf32>
    %cst_13 = arith.constant 9.99999974E-6 : f32
    %40 = vector.broadcast %cst_13 : f32 to vector<16x1xf32>
    %41 = arith.addf %39, %40 : vector<16x1xf32>
    %42 = math.rsqrt %41 : vector<16x1xf32>
    %43 = vector.broadcast %42 : vector<16x1xf32> to vector<16x32xf32>
    %44 = arith.mulf %34, %43 : vector<16x32xf32>
    %45 = vector.broadcast %3 : vector<1x32xf32> to vector<16x32xf32>
    %46 = arith.mulf %44, %45 : vector<16x32xf32>
    %47 = vector.broadcast %4 : vector<1x32xf32> to vector<16x32xf32>
    %48 = arith.addf %46, %47 : vector<16x32xf32>
    %49 = tpu.concatenate %27, %48 in 0 : vector<8x32xf32>, vector<16x32xf32> -> vector<24x32xf32>
    %c0_14 = arith.constant 0 : index
    %c0_15 = arith.constant 0 : index
    %50 = vector.load %arg4[%c0_14, %c0_15] : memref<32x96xf32, #tpu.memory_space<vmem>>, vector<32x96xf32>
    %cst_16 = arith.constant dense<0.000000e+00> : vector<24x96xf32>
    %51 = tpu.matmul %49, %50, %cst_16 {dimension_numbers = #tpu.dot_dimension_numbers<[1], [0], [0], [1], [0, 0, 1, 1], [], []>} : vector<24x32xf32>, vector<32x96xf32>, vector<24x96xf32> -> vector<24x96xf32>
    %c0_17 = arith.constant 0 : index
    %c0_18 = arith.constant 0 : index
    %52 = vector.load %arg5[%c0_17, %c0_18] : memref<1x96xf32, #tpu.memory_space<vmem>>, vector<1x96xf32>
    %53 = vector.broadcast %52 : vector<1x96xf32> to vector<24x96xf32>
    %54 = arith.addf %51, %53 : vector<24x96xf32>
    %55 = vector.extract_strided_slice %54 {offsets = [0, 0], sizes = [8, 32], strides = [1, 1]} : vector<24x96xf32> to vector<8x32xf32>
    %56 = vector.extract_strided_slice %54 {offsets = [8, 32], sizes = [16, 32], strides = [1, 1]} : vector<24x96xf32> to vector<16x32xf32>
    %57 = vector.extract_strided_slice %54 {offsets = [8, 64], sizes = [16, 32], strides = [1, 1]} : vector<24x96xf32> to vector<16x32xf32>
    %c0_19 = arith.constant 0 : index
    %c0_20 = arith.constant 0 : index
    %58 = vector.load %arg10[%c0_19, %c0_20] : memref<64x32xf32, #tpu.memory_space<vmem>>, vector<64x32xf32>
    %59 = tpu.concatenate %56, %56, %56, %56 in 0 : vector<16x32xf32>, vector<16x32xf32>, vector<16x32xf32>, vector<16x32xf32> -> vector<64x32xf32>
    %60 = arith.mulf %59, %58 : vector<64x32xf32>
    %61 = tpu.concatenate %57, %57, %57, %57 in 0 : vector<16x32xf32>, vector<16x32xf32>, vector<16x32xf32>, vector<16x32xf32> -> vector<64x32xf32>
    %62 = arith.mulf %61, %58 : vector<64x32xf32>
    %cst_21 = arith.constant dense<0.000000e+00> : vector<8x64xf32>
    %63 = tpu.matmul %55, %60, %cst_21 {dimension_numbers = #tpu.dot_dimension_numbers<[1], [1], [0], [0], [0, 0, 1, 0], [], []>} : vector<8x32xf32>, vector<64x32xf32>, vector<8x64xf32> -> vector<8x64xf32>
    %cst_22 = arith.constant 0.353553385 : f32
    %64 = vector.broadcast %cst_22 : f32 to vector<8x64xf32>
    %65 = arith.mulf %63, %64 : vector<8x64xf32>
    %c0_23 = arith.constant 0 : index
    %c0_24 = arith.constant 0 : index
    %66 = vector.load %arg12[%c0_23, %c0_24] : memref<8x64xf32, #tpu.memory_space<vmem>>, vector<8x64xf32>
    %67 = arith.addf %65, %66 : vector<8x64xf32>
    %cst_25 = arith.constant dense<0xFF800000> : vector<8xf32>
    %68 = vector.multi_reduction <maximumf>, %67, %cst_25 [1] : vector<8x64xf32> to vector<8xf32>
    %69 = vector.shape_cast %68 : vector<8xf32> to vector<8x1xf32>
    %70 = vector.broadcast %69 : vector<8x1xf32> to vector<8x64xf32>
    %71 = arith.subf %67, %70 : vector<8x64xf32>
    %72 = math.exp %71 : vector<8x64xf32>
    %c0_26 = arith.constant 0 : index
    %c0_27 = arith.constant 0 : index
    %73 = vector.load %arg11[%c0_26, %c0_27] : memref<64x64xf32, #tpu.memory_space<vmem>>, vector<64x64xf32>
    %cst_28 = arith.constant dense<0.000000e+00> : vector<8x64xf32>
    %74 = tpu.matmul %72, %73, %cst_28 {dimension_numbers = #tpu.dot_dimension_numbers<[1], [0], [0], [1], [0, 0, 1, 1], [], []>} : vector<8x64xf32>, vector<64x64xf32>, vector<8x64xf32> -> vector<8x64xf32>
    %cst_29 = arith.constant 1.000000e-30 : f32
    %75 = vector.broadcast %cst_29 : f32 to vector<8x64xf32>
    %76 = arith.maximumf %74, %75 : vector<8x64xf32>
    %77 = arith.divf %72, %76 : vector<8x64xf32>
    %cst_30 = arith.constant dense<0.000000e+00> : vector<8x32xf32>
    %78 = tpu.matmul %77, %62, %cst_30 {dimension_numbers = #tpu.dot_dimension_numbers<[1], [0], [0], [1], [0, 0, 1, 1], [], []>} : vector<8x64xf32>, vector<64x32xf32>, vector<8x32xf32> -> vector<8x32xf32>
    %c0_31 = arith.constant 0 : index
    %c0_32 = arith.constant 0 : index
    %79 = vector.load %arg6[%c0_31, %c0_32] : memref<32x32xf32, #tpu.memory_space<vmem>>, vector<32x32xf32>
    %cst_33 = arith.constant dense<0.000000e+00> : vector<8x32xf32>
    %80 = tpu.matmul %78, %79, %cst_33 {dimension_numbers = #tpu.dot_dimension_numbers<[1], [0], [0], [1], [0, 0, 1, 1], [], []>} : vector<8x32xf32>, vector<32x32xf32>, vector<8x32xf32> -> vector<8x32xf32>
    %81 = arith.addf %27, %80 : vector<8x32xf32>
    %82 = vector.broadcast %5 : vector<1x32xf32> to vector<8x32xf32>
    %83 = arith.addf %81, %82 : vector<8x32xf32>
    %cst_34 = arith.constant dense<0.000000e+00> : vector<8xf32>
    %84 = vector.multi_reduction <add>, %83, %cst_34 [1] : vector<8x32xf32> to vector<8xf32>
    %85 = vector.shape_cast %84 : vector<8xf32> to vector<8x1xf32>
    %cst_35 = arith.constant 3.200000e+01 : f32
    %86 = vector.broadcast %cst_35 : f32 to vector<8x1xf32>
    %87 = arith.divf %85, %86 : vector<8x1xf32>
    %88 = vector.broadcast %87 : vector<8x1xf32> to vector<8x32xf32>
    %89 = arith.subf %83, %88 : vector<8x32xf32>
    %90 = arith.mulf %89, %89 : vector<8x32xf32>
    %cst_36 = arith.constant dense<0.000000e+00> : vector<8xf32>
    %91 = vector.multi_reduction <add>, %90, %cst_36 [1] : vector<8x32xf32> to vector<8xf32>
    %92 = vector.shape_cast %91 : vector<8xf32> to vector<8x1xf32>
    %cst_37 = arith.constant 3.200000e+01 : f32
    %93 = vector.broadcast %cst_37 : f32 to vector<8x1xf32>
    %94 = arith.divf %92, %93 : vector<8x1xf32>
    %cst_38 = arith.constant 9.99999974E-6 : f32
    %95 = vector.broadcast %cst_38 : f32 to vector<8x1xf32>
    %96 = arith.addf %94, %95 : vector<8x1xf32>
    %97 = math.rsqrt %96 : vector<8x1xf32>
    %98 = vector.broadcast %97 : vector<8x1xf32> to vector<8x32xf32>
    %99 = arith.mulf %89, %98 : vector<8x32xf32>
    %c0_39 = arith.constant 0 : index
    %c0_40 = arith.constant 0 : index
    %100 = vector.load %arg7[%c0_39, %c0_40] : memref<32x512xf32, #tpu.memory_space<vmem>>, vector<32x512xf32>
    %cst_41 = arith.constant dense<0.000000e+00> : vector<8x512xf32>
    %101 = tpu.matmul %99, %100, %cst_41 {dimension_numbers = #tpu.dot_dimension_numbers<[1], [0], [0], [1], [0, 0, 1, 1], [], []>} : vector<8x32xf32>, vector<32x512xf32>, vector<8x512xf32> -> vector<8x512xf32>
    %c0_42 = arith.constant 0 : index
    %c0_43 = arith.constant 0 : index
    %102 = vector.load %arg8[%c0_42, %c0_43] : memref<1x512xf32, #tpu.memory_space<vmem>>, vector<1x512xf32>
    %103 = vector.broadcast %102 : vector<1x512xf32> to vector<8x512xf32>
    %104 = arith.addf %101, %103 : vector<8x512xf32>
    %105 = vector.extract_strided_slice %104 {offsets = [0, 0], sizes = [8, 256], strides = [1, 1]} : vector<8x512xf32> to vector<8x256xf32>
    %106 = vector.extract_strided_slice %104 {offsets = [0, 256], sizes = [8, 256], strides = [1, 1]} : vector<8x512xf32> to vector<8x256xf32>
    %107 = arith.negf %105 : vector<8x256xf32>
    %108 = math.exp %107 : vector<8x256xf32>
    %cst_44 = arith.constant 1.000000e+00 : f32
    %109 = vector.broadcast %cst_44 : f32 to vector<8x256xf32>
    %110 = arith.addf %109, %108 : vector<8x256xf32>
    %111 = arith.divf %109, %110 : vector<8x256xf32>
    %112 = arith.mulf %105, %111 : vector<8x256xf32>
    %113 = arith.mulf %112, %106 : vector<8x256xf32>
    %cst_45 = arith.constant dense<0.000000e+00> : vector<8xf32>
    %114 = vector.multi_reduction <add>, %113, %cst_45 [1] : vector<8x256xf32> to vector<8xf32>
    %115 = vector.shape_cast %114 : vector<8xf32> to vector<8x1xf32>
    %cst_46 = arith.constant 2.560000e+02 : f32
    %116 = vector.broadcast %cst_46 : f32 to vector<8x1xf32>
    %117 = arith.divf %115, %116 : vector<8x1xf32>
    %118 = vector.broadcast %117 : vector<8x1xf32> to vector<8x256xf32>
    %119 = arith.subf %113, %118 : vector<8x256xf32>
    %120 = arith.mulf %119, %119 : vector<8x256xf32>
    %cst_47 = arith.constant dense<0.000000e+00> : vector<8xf32>
    %121 = vector.multi_reduction <add>, %120, %cst_47 [1] : vector<8x256xf32> to vector<8xf32>
    %122 = vector.shape_cast %121 : vector<8xf32> to vector<8x1xf32>
    %cst_48 = arith.constant 2.560000e+02 : f32
    %123 = vector.broadcast %cst_48 : f32 to vector<8x1xf32>
    %124 = arith.divf %122, %123 : vector<8x1xf32>
    %cst_49 = arith.constant 9.99999997E-7 : f32
    %125 = vector.broadcast %cst_49 : f32 to vector<8x1xf32>
    %126 = arith.addf %124, %125 : vector<8x1xf32>
    %127 = math.rsqrt %126 : vector<8x1xf32>
    %128 = vector.broadcast %127 : vector<8x1xf32> to vector<8x256xf32>
    %129 = arith.mulf %119, %128 : vector<8x256xf32>
    %c0_50 = arith.constant 0 : index
    %c0_51 = arith.constant 0 : index
    %130 = vector.load %arg9[%c0_50, %c0_51] : memref<256x32xf32, #tpu.memory_space<vmem>>, vector<256x32xf32>
    %cst_52 = arith.constant dense<0.000000e+00> : vector<8x32xf32>
    %131 = tpu.matmul %129, %130, %cst_52 {dimension_numbers = #tpu.dot_dimension_numbers<[1], [0], [0], [1], [0, 0, 1, 1], [], []>} : vector<8x256xf32>, vector<256x32xf32>, vector<8x32xf32> -> vector<8x32xf32>
    %132 = arith.addf %83, %131 : vector<8x32xf32>
    %133 = vector.broadcast %6 : vector<1x32xf32> to vector<8x32xf32>
    %134 = arith.addf %132, %133 : vector<8x32xf32>
    %c0_53 = arith.constant 0 : index
    %c0_54 = arith.constant 0 : index
    %135 = vector.load %arg13[%c0_53, %c0_54] : memref<8x32xf32, #tpu.memory_space<vmem>>, vector<8x32xf32>
    tpu.vector_store %arg13[%c0_53, %c0_54], %134 {strides = array<i32>} : memref<8x32xf32, #tpu.memory_space<vmem>>, vector<8x32xf32>,
    return
  }
  func.func @transform_0(%arg0: i32) -> (i32, i32) {
    %c0_i32 = arith.constant 0 : i32
    %c0_i32_0 = arith.constant 0 : i32
    return %arg0, %c0_i32 : i32, i32
  }
  func.func @transform_1(%arg0: i32) -> (i32, i32) {
    %c0_i32 = arith.constant 0 : i32
    %c0_i32_0 = arith.constant 0 : i32
    return %arg0, %c0_i32 : i32, i32
  }
  func.func @transform_2(%arg0: i32) -> (i32, i32) {
    %c0_i32 = arith.constant 0 : i32
    %c0_i32_0 = arith.constant 0 : i32
    %c0_i32_1 = arith.constant 0 : i32
    return %c0_i32, %c0_i32_0 : i32, i32
  }
  func.func @transform_3(%arg0: i32) -> (i32, i32) {
    %c0_i32 = arith.constant 0 : i32
    %c0_i32_0 = arith.constant 0 : i32
    %c0_i32_1 = arith.constant 0 : i32
    return %c0_i32, %c0_i32_0 : i32, i32
  }
  func.func @transform_4(%arg0: i32) -> (i32, i32) {
    %c0_i32 = arith.constant 0 : i32
    %c0_i32_0 = arith.constant 0 : i32
    %c0_i32_1 = arith.constant 0 : i32
    return %c0_i32, %c0_i32_0 : i32, i32
  }
  func.func @transform_5(%arg0: i32) -> (i32, i32) {
    %c0_i32 = arith.constant 0 : i32
    %c0_i32_0 = arith.constant 0 : i32
    %c0_i32_1 = arith.constant 0 : i32
    return %c0_i32, %c0_i32_0 : i32, i32
  }
  func.func @transform_6(%arg0: i32) -> (i32, i32) {
    %c0_i32 = arith.constant 0 : i32
    %c0_i32_0 = arith.constant 0 : i32
    %c0_i32_1 = arith.constant 0 : i32
    return %c0_i32, %c0_i32_0 : i32, i32
  }
  func.func @transform_7(%arg0: i32) -> (i32, i32) {
    %c0_i32 = arith.constant 0 : i32
    %c0_i32_0 = arith.constant 0 : i32
    %c0_i32_1 = arith.constant 0 : i32
    return %c0_i32, %c0_i32_0 : i32, i32
  }
  func.func @transform_8(%arg0: i32) -> (i32, i32) {
    %c0_i32 = arith.constant 0 : i32
    %c0_i32_0 = arith.constant 0 : i32
    %c0_i32_1 = arith.constant 0 : i32
    return %c0_i32, %c0_i32_0 : i32, i32
  }
  func.func @transform_9(%arg0: i32) -> (i32, i32) {
    %c0_i32 = arith.constant 0 : i32
    %c0_i32_0 = arith.constant 0 : i32
    %c0_i32_1 = arith.constant 0 : i32
    return %c0_i32, %c0_i32_0 : i32, i32
  }
  func.func @transform_10(%arg0: i32) -> (i32, i32) {
    %c0_i32 = arith.constant 0 : i32
    %c0_i32_0 = arith.constant 0 : i32
    %c0_i32_1 = arith.constant 0 : i32
    return %c0_i32, %c0_i32_0 : i32, i32
  }
  func.func @transform_11(%arg0: i32) -> (i32, i32) {
    %c0_i32 = arith.constant 0 : i32
    %c0_i32_0 = arith.constant 0 : i32
    %c0_i32_1 = arith.constant 0 : i32
    return %c0_i32, %c0_i32_0 : i32, i32
  }
  func.func @transform_12(%arg0: i32) -> (i32, i32) {
    %c0_i32 = arith.constant 0 : i32
    %c0_i32_0 = arith.constant 0 : i32
    return %arg0, %c0_i32 : i32, i32
  }
}

</mosaic_0001>

<llo_original>
// kernel: tpu_custom_call.1
$region0: #{tpu_custom_call.1}
  #allocation0 [shape = 'u32[]', space=smem, size = 0x4, offset = 0x4, fixed_abs, tag = 'smem constant byte address 0x4 - core index']
  #allocation1 [shape = 'u32[144,128]{1,0:T(1,128)}', space=vmem, size = 0x12000, scoped, tag = 'internal scratch']
  %s0 = inlined_call_operand.vmem [shape: f32[16,32], index: 0, kind: input, shape index: {}]
  %s1 = inlined_call_operand.vmem [shape: f32[32,32], index: 1, kind: input, shape index: {}]
  %s2 = inlined_call_operand.vmem [shape: f32[8,32], index: 2, kind: input, shape index: {}]
  %s3 = inlined_call_operand.vmem [shape: f32[32,96], index: 3, kind: input, shape index: {}]
  %s4 = inlined_call_operand.vmem [shape: f32[1,96], index: 4, kind: input, shape index: {}]
  %s5 = inlined_call_operand.vmem [shape: f32[32,32], index: 5, kind: input, shape index: {}]
  %s6 = inlined_call_operand.vmem [shape: f32[32,512], index: 6, kind: input, shape index: {}]
  %s7 = inlined_call_operand.vmem [shape: f32[1,512], index: 7, kind: input, shape index: {}]
  %s8 = inlined_call_operand.vmem [shape: f32[256,32], index: 8, kind: input, shape index: {}]
  %s9 = inlined_call_operand.vmem [shape: f32[64,32], index: 9, kind: input, shape index: {}]
  %s10 = inlined_call_operand.vmem [shape: f32[64,64], index: 10, kind: input, shape index: {}]
  %s11 = inlined_call_operand.vmem [shape: f32[8,64], index: 11, kind: input, shape index: {}]
  %s12 = inlined_call_operand.hbm [shape: f32[16,32], index: 12, kind: output, shape index: {}]
  %s13 = sld [smem:[#allocation0]]
  $region81: #{tpu_custom_call.1} parent=0
    _
  %s15 = ssub.s32 1, %s13
  %s16 = scalar_select 0, %s15, %s13
  $region1: #{tpu_custom_call.1} parent=0
    #allocation2 [shape = 'u8[8192]{0}', space=vmem, size = 0x2000, scoped, tag = 'output window, operand 0']
    #allocation3 [shape = 's32[2]{0}', space=sflag, size = 0x8, scoped, tag = 'scoped memory for tpu_custom_call.1']
    %17 = vsyncpa [#allocation3], 0
    %s18 = scalar_lea.sflag [#allocation3], 1
    %19 = vsyncpa %s18, 0
    loop: start=0, step=1, limit=4
    $region2: #{tpu_custom_call.1} parent=1 // loop_pre_header
      _
    $region3: #{tpu_custom_call.1} parent=1 // loop_header
      %s21 = sphi 0, %s25
      %p22 = scmp.ge.s32.totalorder %s21, 4
      %s31 = sphi 0, %s33
      %s34 = sphi 0, %s31
      %s35 = sphi 0, %s34
      %s51 = sphi 0, %s35
      %s57 = sphi 0, %s59
      %s60 = sphi 0, %s57
      %s61 = sphi 0, %s60
      %s77 = sphi 0, %s61
      %s81 = sphi 0, %s81
      %s83 = sphi 0, %s81
      %s84 = sphi 0, %s83
      %s98 = sphi 0, %s84
      %s102 = sphi 0, %s102
      %s104 = sphi 0, %s102
      %s105 = sphi 0, %s104
      %s119 = sphi 0, %s105
      %s123 = sphi 0, %s123
      %s125 = sphi 0, %s123
      %s126 = sphi 0, %s125
      %s140 = sphi 0, %s126
      %s144 = sphi 0, %s144
      %s146 = sphi 0, %s144
      %s147 = sphi 0, %s146
      %s161 = sphi 0, %s147
      %s165 = sphi 0, %s165
      %s167 = sphi 0, %s165
      %s168 = sphi 0, %s167
      %s182 = sphi 0, %s168
      %s186 = sphi 0, %s186
      %s188 = sphi 0, %s186
      %s189 = sphi 0, %s188
      %s203 = sphi 0, %s189
      %s207 = sphi 0, %s207
      %s209 = sphi 0, %s207
      %s210 = sphi 0, %s209
      %s224 = sphi 0, %s210
      %s228 = sphi 0, %s228
      %s230 = sphi 0, %s228
      %s231 = sphi 0, %s230
      %s245 = sphi 0, %s231
      %s249 = sphi 0, %s249
      %s251 = sphi 0, %s249
      %s252 = sphi 0, %s251
      %s266 = sphi 0, %s252
      %s270 = sphi 0, %s270
      %s272 = sphi 0, %s270
      %s273 = sphi 0, %s272
      %s287 = sphi 0, %s273
      %s293 = sphi 0, %s295
      %s296 = sphi 0, %s293
      %s297 = sphi 0, %s296
      %s313 = sphi 0, %s297
    $region4: #{tpu_custom_call.1} parent=1 // loop_header_branch
      %24 = sbr.rel (%p22) target = $region8
    $region5: #{tpu_custom_call.1} parent=1 // loop_body
      %s26 = ssub.s32 %s21, 1
      %s27 = ssub.s32 %s21, 2
      %s28 = sadd.s32 %s21, 1
      %s29 = ssub.s32 %s21, %s28
      %p30 = scmp.eq.s32.totalorder %s29, 0
      %s32 = sadd.s32 %s31, 1
      %s33 = scalar_select %p30, %s31, %s32
      %p36 = pneg %p30
      %p37 = scmp.eq.s32.totalorder %s21, 1
      %p38 = por %p36, %p37
      %p39 = scmp.ne.s32.totalorder %s31, %s34
      %p40 = scmp.eq.s32.totalorder %s21, 0
      %p41 = por %p39, %p40
      %p42 = scmp.ne.s32.totalorder %s31, %s34
      %p43 = scmp.eq.s32.totalorder %s26, 1
      %p44 = por %p42, %p43
      %p45 = scmp.ne.s32.totalorder %s34, %s35
      %p46 = scmp.eq.s32.totalorder %s26, 0
      %p47 = por %p45, %p46
      %p48 = scmp.ne.s32.totalorder %s34, %s35
      %p49 = scmp.eq.s32.totalorder %s27, 1
      %p50 = por %p48, %p49
      %p52 = scmp.ne.s32.totalorder %s35, %s51
      %p53 = scmp.eq.s32.totalorder %s27, 0
      %p54 = por %p52, %p53
      %s55 = ssub.s32 %s21, %s28
      %p56 = scmp.eq.s32.totalorder %s55, 0
      %s58 = sadd.s32 %s57, 1
      %s59 = scalar_select %p56, %s57, %s58
      %p62 = pneg %p56
      %p63 = scmp.eq.s32.totalorder %s21, 1
      %p64 = por %p62, %p63
      %p65 = scmp.ne.s32.totalorder %s57, %s60
      %p66 = scmp.eq.s32.totalorder %s21, 0
      %p67 = por %p65, %p66
      %p68 = scmp.ne.s32.totalorder %s57, %s60
      %p69 = scmp.eq.s32.totalorder %s26, 1
      %p70 = por %p68, %p69
      %p71 = scmp.ne.s32.totalorder %s60, %s61
      %p72 = scmp.eq.s32.totalorder %s26, 0
      %p73 = por %p71, %p72
      %p74 = scmp.ne.s32.totalorder %s60, %s61
      %p75 = scmp.eq.s32.totalorder %s27, 1
      %p76 = por %p74, %p75
      %p78 = scmp.ne.s32.totalorder %s61, %s77
      %p79 = scmp.eq.s32.totalorder %s27, 0
      %p80 = por %p78, %p79
      %s82 = sadd.s32 %s81, 1
      %p85 = scmp.eq.s32.totalorder %s21, 1
      %p86 = scmp.ne.s32.totalorder %s81, %s83
      %p87 = scmp.eq.s32.totalorder %s21, 0
      %p88 = por %p86, %p87
      %p89 = scmp.ne.s32.totalorder %s81, %s83
      %p90 = scmp.eq.s32.totalorder %s26, 1
      %p91 = por %p89, %p90
      %p92 = scmp.ne.s32.totalorder %s83, %s84
      %p93 = scmp.eq.s32.totalorder %s26, 0
      %p94 = por %p92, %p93
      %p95 = scmp.ne.s32.totalorder %s83, %s84
      %p96 = scmp.eq.s32.totalorder %s27, 1
      %p97 = por %p95, %p96
      %p99 = scmp.ne.s32.totalorder %s84, %s98
      %p100 = scmp.eq.s32.totalorder %s27, 0
      %p101 = por %p99, %p100
      %s103 = sadd.s32 %s102, 1
      %p106 = scmp.eq.s32.totalorder %s21, 1
      %p107 = scmp.ne.s32.totalorder %s102, %s104
      %p108 = scmp.eq.s32.totalorder %s21, 0
      %p109 = por %p107, %p108
      %p110 = scmp.ne.s32.totalorder %s102, %s104
      %p111 = scmp.eq.s32.totalorder %s26, 1
      %p112 = por %p110, %p111
      %p113 = scmp.ne.s32.totalorder %s104, %s105
      %p114 = scmp.eq.s32.totalorder %s26, 0
      %p115 = por %p113, %p114
      %p116 = scmp.ne.s32.totalorder %s104, %s105
      %p117 = scmp.eq.s32.totalorder %s27, 1
      %p118 = por %p116, %p117
      %p120 = scmp.ne.s32.totalorder %s105, %s119
      %p121 = scmp.eq.s32.totalorder %s27, 0
      %p122 = por %p120, %p121
      %s124 = sadd.s32 %s123, 1
      %p127 = scmp.eq.s32.totalorder %s21, 1
      %p128 = scmp.ne.s32.totalorder %s123, %s125
      %p129 = scmp.eq.s32.totalorder %s21, 0
      %p130 = por %p128, %p129
      %p131 = scmp.ne.s32.totalorder %s123, %s125
      %p132 = scmp.eq.s32.totalorder %s26, 1
      %p133 = por %p131, %p132
      %p134 = scmp.ne.s32.totalorder %s125, %s126
      %p135 = scmp.eq.s32.totalorder %s26, 0
      %p136 = por %p134, %p135
      %p137 = scmp.ne.s32.totalorder %s125, %s126
      %p138 = scmp.eq.s32.totalorder %s27, 1
      %p139 = por %p137, %p138
      %p141 = scmp.ne.s32.totalorder %s126, %s140
      %p142 = scmp.eq.s32.totalorder %s27, 0
      %p143 = por %p141, %p142
      %s145 = sadd.s32 %s144, 1
      %p148 = scmp.eq.s32.totalorder %s21, 1
      %p149 = scmp.ne.s32.totalorder %s144, %s146
      %p150 = scmp.eq.s32.totalorder %s21, 0
      %p151 = por %p149, %p150
      %p152 = scmp.ne.s32.totalorder %s144, %s146
      %p153 = scmp.eq.s32.totalorder %s26, 1
      %p154 = por %p152, %p153
      %p155 = scmp.ne.s32.totalorder %s146, %s147
      %p156 = scmp.eq.s32.totalorder %s26, 0
      %p157 = por %p155, %p156
      %p158 = scmp.ne.s32.totalorder %s146, %s147
      %p159 = scmp.eq.s32.totalorder %s27, 1
      %p160 = por %p158, %p159
      %p162 = scmp.ne.s32.totalorder %s147, %s161
      %p163 = scmp.eq.s32.totalorder %s27, 0
      %p164 = por %p162, %p163
      %s166 = sadd.s32 %s165, 1
      %p169 = scmp.eq.s32.totalorder %s21, 1
      %p170 = scmp.ne.s32.totalorder %s165, %s167
      %p171 = scmp.eq.s32.totalorder %s21, 0
      %p172 = por %p170, %p171
      %p173 = scmp.ne.s32.totalorder %s165, %s167
      %p174 = scmp.eq.s32.totalorder %s26, 1
      %p175 = por %p173, %p174
      %p176 = scmp.ne.s32.totalorder %s167, %s168
      %p177 = scmp.eq.s32.totalorder %s26, 0
      %p178 = por %p176, %p177
      %p179 = scmp.ne.s32.totalorder %s167, %s168
      %p180 = scmp.eq.s32.totalorder %s27, 1
      %p181 = por %p179, %p180
      %p183 = scmp.ne.s32.totalorder %s168, %s182
      %p184 = scmp.eq.s32.totalorder %s27, 0
      %p185 = por %p183, %p184
      %s187 = sadd.s32 %s186, 1
      %p190 = scmp.eq.s32.totalorder %s21, 1
      %p191 = scmp.ne.s32.totalorder %s186, %s188
      %p192 = scmp.eq.s32.totalorder %s21, 0
      %p193 = por %p191, %p192
      %p194 = scmp.ne.s32.totalorder %s186, %s188
      %p195 = scmp.eq.s32.totalorder %s26, 1
      %p196 = por %p194, %p195
      %p197 = scmp.ne.s32.totalorder %s188, %s189
      %p198 = scmp.eq.s32.totalorder %s26, 0
      %p199 = por %p197, %p198
      %p200 = scmp.ne.s32.totalorder %s188, %s189
      %p201 = scmp.eq.s32.totalorder %s27, 1
      %p202 = por %p200, %p201
      %p204 = scmp.ne.s32.totalorder %s189, %s203
      %p205 = scmp.eq.s32.totalorder %s27, 0
      %p206 = por %p204, %p205
      %s208 = sadd.s32 %s207, 1
      %p211 = scmp.eq.s32.totalorder %s21, 1
      %p212 = scmp.ne.s32.totalorder %s207, %s209
      %p213 = scmp.eq.s32.totalorder %s21, 0
      %p214 = por %p212, %p213
      %p215 = scmp.ne.s32.totalorder %s207, %s209
      %p216 = scmp.eq.s32.totalorder %s26, 1
      %p217 = por %p215, %p216
      %p218 = scmp.ne.s32.totalorder %s209, %s210
      %p219 = scmp.eq.s32.totalorder %s26, 0
      %p220 = por %p218, %p219
      %p221 = scmp.ne.s32.totalorder %s209, %s210
      %p222 = scmp.eq.s32.totalorder %s27, 1
      %p223 = por %p221, %p222
      %p225 = scmp.ne.s32.totalorder %s210, %s224
      %p226 = scmp.eq.s32.totalorder %s27, 0
      %p227 = por %p225, %p226
      %s229 = sadd.s32 %s228, 1
      %p232 = scmp.eq.s32.totalorder %s21, 1
      %p233 = scmp.ne.s32.totalorder %s228, %s230
      %p234 = scmp.eq.s32.totalorder %s21, 0
      %p235 = por %p233, %p234
      %p236 = scmp.ne.s32.totalorder %s228, %s230
      %p237 = scmp.eq.s32.totalorder %s26, 1
      %p238 = por %p236, %p237
      %p239 = scmp.ne.s32.totalorder %s230, %s231
      %p240 = scmp.eq.s32.totalorder %s26, 0
      %p241 = por %p239, %p240
      %p242 = scmp.ne.s32.totalorder %s230, %s231
      %p243 = scmp.eq.s32.totalorder %s27, 1
      %p244 = por %p242, %p243
      %p246 = scmp.ne.s32.totalorder %s231, %s245
      %p247 = scmp.eq.s32.totalorder %s27, 0
      %p248 = por %p246, %p247
      %s250 = sadd.s32 %s249, 1
      %p253 = scmp.eq.s32.totalorder %s21, 1
      %p254 = scmp.ne.s32.totalorder %s249, %s251
      %p255 = scmp.eq.s32.totalorder %s21, 0
      %p256 = por %p254, %p255
      %p257 = scmp.ne.s32.totalorder %s249, %s251
      %p258 = scmp.eq.s32.totalorder %s26, 1
      %p259 = por %p257, %p258
      %p260 = scmp.ne.s32.totalorder %s251, %s252
      %p261 = scmp.eq.s32.totalorder %s26, 0
      %p262 = por %p260, %p261
      %p263 = scmp.ne.s32.totalorder %s251, %s252
      %p264 = scmp.eq.s32.totalorder %s27, 1
      %p265 = por %p263, %p264
      %p267 = scmp.ne.s32.totalorder %s252, %s266
      %p268 = scmp.eq.s32.totalorder %s27, 0
      %p269 = por %p267, %p268
      %s271 = sadd.s32 %s270, 1
      %p274 = scmp.eq.s32.totalorder %s21, 1
      %p275 = scmp.ne.s32.totalorder %s270, %s272
      %p276 = scmp.eq.s32.totalorder %s21, 0
      %p277 = por %p275, %p276
      %p278 = scmp.ne.s32.totalorder %s270, %s272
      %p279 = scmp.eq.s32.totalorder %s26, 1
      %p280 = por %p278, %p279
      %p281 = scmp.ne.s32.totalorder %s272, %s273
      %p282 = scmp.eq.s32.totalorder %s26, 0
      %p283 = por %p281, %p282
      %p284 = scmp.ne.s32.totalorder %s272, %s273
      %p285 = scmp.eq.s32.totalorder %s27, 1
      %p286 = por %p284, %p285
      %p288 = scmp.ne.s32.totalorder %s273, %s287
      %p289 = scmp.eq.s32.totalorder %s27, 0
      %p290 = por %p288, %p289
      %s291 = ssub.s32 %s21, %s28
      %p292 = scmp.eq.s32.totalorder %s291, 0
      %s294 = sadd.s32 %s293, 1
      %s295 = scalar_select %p292, %s293, %s294
      %p298 = pneg %p292
      %p299 = scmp.eq.s32.totalorder %s21, 1
      %p300 = por %p298, %p299
      %p301 = scmp.ne.s32.totalorder %s293, %s296
      %p302 = scmp.eq.s32.totalorder %s21, 0
      %p303 = por %p301, %p302
      %p304 = scmp.ne.s32.totalorder %s293, %s296
      %p305 = scmp.eq.s32.totalorder %s26, 1
      %p306 = por %p304, %p305
      %p307 = scmp.ne.s32.totalorder %s296, %s297
      %p308 = scmp.eq.s32.totalorder %s26, 0
      %p309 = por %p307, %p308
      %p310 = scmp.ne.s32.totalorder %s296, %s297
      %p311 = scmp.eq.s32.totalorder %s27, 1
      %p312 = por %p310, %p311
      %p314 = scmp.ne.s32.totalorder %s297, %s313
      %p315 = scmp.eq.s32.totalorder %s27, 0
      %p316 = por %p314, %p315
      %p317 = scmp.le.s32.totalorder 1, %s21
      %p318 = scmp.lt.s32.totalorder %s21, 3
      %p319 = pnand %p317, %p318
      %p320 = pneg %p319
      // Predicated region
      $region9: #{tpu_custom_call.1} parent=5 // pred_check
        _
      $region10: #{tpu_custom_call.1} parent=5 // pred_check_branch
        %322 = sbr.rel (%p319) target = $region12
      $region11: #{tpu_custom_call.1} parent=5 // pred_region
        %s323 = ssub.s32 %s21, 1
        // Predicated region
        $region13: #{tpu_custom_call.1} parent=11 // pred_check
          %p324 = pneg %p94
        $region14: #{tpu_custom_call.1} parent=11 // pred_check_branch
          %326 = sbr.rel (%p324) target = $region16
        $region15: #{tpu_custom_call.1} parent=11 // pred_region
          _
        $region16: #{tpu_custom_call.1} parent=11 // pred_fallthru
          _
        // Predicated region
        $region17: #{tpu_custom_call.1} parent=11 // pred_check
          %p327 = pneg %p115
        $region18: #{tpu_custom_call.1} parent=11 // pred_check_branch
          %329 = sbr.rel (%p327) target = $region20
        $region19: #{tpu_custom_call.1} parent=11 // pred_region
          _
        $region20: #{tpu_custom_call.1} parent=11 // pred_fallthru
          _
        // Predicated region
        $region21: #{tpu_custom_call.1} parent=11 // pred_check
          %p330 = pneg %p136
        $region22: #{tpu_custom_call.1} parent=11 // pred_check_branch
          %332 = sbr.rel (%p330) target = $region24
        $region23: #{tpu_custom_call.1} parent=11 // pred_region
          _
        $region24: #{tpu_custom_call.1} parent=11 // pred_fallthru
          _
        // Predicated region
        $region25: #{tpu_custom_call.1} parent=11 // pred_check
          %p333 = pneg %p157
        $region26: #{tpu_custom_call.1} parent=11 // pred_check_branch
          %335 = sbr.rel (%p333) target = $region28
        $region27: #{tpu_custom_call.1} parent=11 // pred_region
          _
        $region28: #{tpu_custom_call.1} parent=11 // pred_fallthru
          _
        // Predicated region
        $region29: #{tpu_custom_call.1} parent=11 // pred_check
          %p336 = pneg %p178
        $region30: #{tpu_custom_call.1} parent=11 // pred_check_branch
          %338 = sbr.rel (%p336) target = $region32
        $region31: #{tpu_custom_call.1} parent=11 // pred_region
          _
        $region32: #{tpu_custom_call.1} parent=11 // pred_fallthru
          _
        // Predicated region
        $region33: #{tpu_custom_call.1} parent=11 // pred_check
          %p339 = pneg %p199
        $region34: #{tpu_custom_call.1} parent=11 // pred_check_branch
          %341 = sbr.rel (%p339) target = $region36
        $region35: #{tpu_custom_call.1} parent=11 // pred_region
          _
        $region36: #{tpu_custom_call.1} parent=11 // pred_fallthru
          _
        // Predicated region
        $region37: #{tpu_custom_call.1} parent=11 // pred_check
          %p342 = pneg %p220
        $region38: #{tpu_custom_call.1} parent=11 // pred_check_branch
          %344 = sbr.rel (%p342) target = $region40
        $region39: #{tpu_custom_call.1} parent=11 // pred_region
          _
        $region40: #{tpu_custom_call.1} parent=11 // pred_fallthru
          _
        // Predicated region
        $region41: #{tpu_custom_call.1} parent=11 // pred_check
          %p345 = pneg %p241
        $region42: #{tpu_custom_call.1} parent=11 // pred_check_branch
          %347 = sbr.rel (%p345) target = $region44
        $region43: #{tpu_custom_call.1} parent=11 // pred_region
          _
        $region44: #{tpu_custom_call.1} parent=11 // pred_fallthru
          _
        // Predicated region
        $region45: #{tpu_custom_call.1} parent=11 // pred_check
          %p348 = pneg %p262
        $region46: #{tpu_custom_call.1} parent=11 // pred_check_branch
          %350 = sbr.rel (%p348) target = $region48
        $region47: #{tpu_custom_call.1} parent=11 // pred_region
          _
        $region48: #{tpu_custom_call.1} parent=11 // pred_fallthru
          _
        // Predicated region
        $region49: #{tpu_custom_call.1} parent=11 // pred_check
          %p351 = pneg %p283
        $region50: #{tpu_custom_call.1} parent=11 // pred_check_branch
          %353 = sbr.rel (%p351) target = $region52
        $region51: #{tpu_custom_call.1} parent=11 // pred_region
          _
        $region52: #{tpu_custom_call.1} parent=11 // pred_fallthru
          _
      $region12: #{tpu_custom_call.1} parent=5 // pred_fallthru
        _
      %p354 = scmp.lt.s32.totalorder %s21, 2
      // Predicated region
      $region53: #{tpu_custom_call.1} parent=5 // pred_check
        %p355 = pneg %p354
      $region54: #{tpu_custom_call.1} parent=5 // pred_check_branch
        %357 = sbr.rel (%p355) target = $region56
      $region55: #{tpu_custom_call.1} parent=5 // pred_region
        // Predicated region
        $region57: #{tpu_custom_call.1} parent=55 // pred_check
          %p358 = pneg %p41
        $region58: #{tpu_custom_call.1} parent=55 // pred_check_branch
          %360 = sbr.rel (%p358) target = $region60
        $region59: #{tpu_custom_call.1} parent=55 // pred_region
          %p361 = scmp.lt.s32.totalorder %s21, 1
          %s362 = scalar_select %p361, %s21, 1
          %s363 = smul.addr %s362, 8
          %s364 = scalar_lea.vmem %s0, %s363
        $region60: #{tpu_custom_call.1} parent=55 // pred_fallthru
          _
        // Predicated region
        $region61: #{tpu_custom_call.1} parent=55 // pred_check
          %p365 = pneg %p67
        $region62: #{tpu_custom_call.1} parent=55 // pred_check_branch
          %367 = sbr.rel (%p365) target = $region64
        $region63: #{tpu_custom_call.1} parent=55 // pred_region
          %s368 = smul.u32 2, %s21
          %p369 = scmp.lt.s32.totalorder %s368, 3
          %s370 = scalar_select %p369, %s368, 3
          %s371 = smul.addr %s370, 8
          %s372 = scalar_lea.vmem %s1, %s371
          %s373 = smul.u32 2, %s21
        $region64: #{tpu_custom_call.1} parent=55 // pred_fallthru
          _
      $region56: #{tpu_custom_call.1} parent=5 // pred_fallthru
        _
      %p374 = scmp.le.s32.totalorder 1, %s21
      %p375 = scmp.lt.s32.totalorder %s21, 3
      %p376 = pnand %p374, %p375
      %p377 = pneg %p376
      // Predicated region
      $region65: #{tpu_custom_call.1} parent=5 // pred_check
        _
      $region66: #{tpu_custom_call.1} parent=5 // pred_check_branch
        %379 = sbr.rel (%p376) target = $region68
      $region67: #{tpu_custom_call.1} parent=5 // pred_region
        %s380 = ssub.s32 %s21, 1
        %p381 = scmp.lt.s32.totalorder %s26, 1
        %s382 = scalar_select %p381, %s26, 1
        %s383 = smul.addr %s382, 8
        %s384 = scalar_lea.vmem %s0, %s383
        %p385 = pneg %p47
        %p386 = pneg %p44
        %s387 = smul.u32 2, %s26
        %p388 = scmp.lt.s32.totalorder %s387, 3
        %s389 = scalar_select %p388, %s387, 3
        %s390 = smul.addr %s389, 8
        %s391 = scalar_lea.vmem %s1, %s390
        %p392 = pneg %p73
        %p393 = pneg %p70
        %p394 = pneg %p94
        %p395 = pneg %p91
        %p396 = pneg %p115
        %p397 = pneg %p112
        %p398 = pneg %p136
        %p399 = pneg %p133
        %p400 = pneg %p157
        %p401 = pneg %p154
        %p402 = pneg %p178
        %p403 = pneg %p175
        %p404 = pneg %p199
        %p405 = pneg %p196
        %p406 = pneg %p220
        %p407 = pneg %p217
        %p408 = pneg %p241
        %p409 = pneg %p238
        %p410 = pneg %p262
        %p411 = pneg %p259
        %p412 = pneg %p283
        %p413 = pneg %p280
        %p414 = pneg %p309
        %p415 = pneg %p306
        %s416 = sand.u32 %s296, 1
        %s417 = scalar_lea.sflag [#allocation3], %s416
        %s418 = sand.u32 %s296, 1
        %s419 = smul.addr %s418, 8
        %s420 = scalar_lea.vmem [#allocation2], %s419
        %p421 = scmp.lt.s32.totalorder %s26, 1
        %s422 = scalar_select %p421, %s26, 1
        %s423 = smul.addr %s422, 8
        %s424 = scalar_lea.vmem %s0, %s423
        %s425 = smul.u32 2, %s26
        %p426 = scmp.lt.s32.totalorder %s425, 3
        %s427 = scalar_select %p426, %s425, 3
        %s428 = smul.addr %s427, 8
        %s429 = scalar_lea.vmem %s1, %s428
        %s430 = smul.u32 2, %s26
        %v431 = vld [vmem:[%s2] sm:$0xff]
        %v432 = vld [vmem:[%s424] sm:$0xff]
        %vm433 = vcmask 261120
        %v434 = vsel %vm433, %v432, 0.0
        %435 = vadd.xlane.f32.xlu0 %v434
        %v436 = vpop.xlane.xlu0 %435
        %v437 = vrcp.pop 32.0
        %v438 = vmul.f32 %v436, %v437
        %v439 = vsub.f32 %v432, %v438
        %v440 = vmul.f32 %v439, %v439
        %v441 = vsel %vm433, %v440, 0.0
        %442 = vadd.xlane.f32.xlu0 %v441
        %v443 = vpop.xlane.xlu0 %442
        %v444 = vmul.f32 %v443, %v437
        %v445 = vadd.f32 %v444, 1e-05
        %v446 = vrsqrt.pop %v445
        %v447 = vmul.f32 %v439, %v446
        %v448 = vlaneseq
        %v449 = vshrl.u32 %v448, 7
        %v450 = vsub.s32 0, %v449
        %v451 = vrot.slane %v431, %v450
        %v452 = vmul.f32 %v447, %v451
        %v453 = vlaneseq
        %v454 = vshrl.u32 %v453, 7
        %v455 = vsub.s32 1, %v454
        %v456 = vrot.slane %v431, %v455
        %v457 = vadd.f32 %v452, %v456
        %v458 = vld [vmem:[%s429] sm:$0xff]
        %v459 = vld [vmem:[%s429 + $0x8] sm:$0xff]
        %v460 = vsel %vm433, %v458, 0.0
        %461 = vadd.xlane.f32.xlu0 %v460
        %v462 = vpop.xlane.xlu0 %461
        %v463 = vsel %vm433, %v459, 0.0
        %464 = vadd.xlane.f32.xlu0 %v463
        %v465 = vpop.xlane.xlu0 %464
        %v466 = vmul.f32 %v462, %v437
        %v467 = vmul.f32 %v465, %v437
        %v468 = vsub.f32 %v458, %v466
        %v469 = vsub.f32 %v459, %v467
        %v470 = vmul.f32 %v468, %v468
        %v471 = vmul.f32 %v469, %v469
        %v472 = vsel %vm433, %v470, 0.0
        %473 = vadd.xlane.f32.xlu0 %v472
        %v474 = vpop.xlane.xlu0 %473
        %v475 = vsel %vm433, %v471, 0.0
        %476 = vadd.xlane.f32.xlu0 %v475
        %v477 = vpop.xlane.xlu0 %476
        %v478 = vmul.f32 %v474, %v437
        %v479 = vmul.f32 %v477, %v437
        %v480 = vadd.f32 %v478, 1e-05
        %v481 = vadd.f32 %v479, 1e-05
        %v482 = vrsqrt.pop %v480
        %v483 = vrsqrt.pop %v481
        %v484 = vmul.f32 %v468, %v482
        %v485 = vmul.f32 %v469, %v483
        %v486 = vlaneseq
        %v487 = vshrl.u32 %v486, 7
        %v488 = vsub.s32 2, %v487
        %v489 = vrot.slane %v431, %v488
        %v490 = vmul.f32 %v484, %v489
        %v491 = vmul.f32 %v485, %v489
        %v492 = vlaneseq
        %v493 = vshrl.u32 %v492, 7
        %v494 = vsub.s32 3, %v493
        %v495 = vrot.slane %v431, %v494
        %v496 = vadd.f32 %v490, %v495
        %v497 = vadd.f32 %v491, %v495
        %v498 = vld [vmem:[%s3] sm:$0xff]
        %v499 = vld [vmem:[%s3 + $0x8] sm:$0xff]
        %v500 = vld [vmem:[%s3 + $0x10] sm:$0xff]
        %v501 = vld [vmem:[%s3 + $0x18] sm:$0xff]
        %v502 = vld [vmem:[%s4] sm:$0x1]
        %v504 = vlaneseq
        %v505 = vshrl.u32 %v504, 7
        %v506 = vsub.s32 0, %v505
        %v507 = vrot.slane %v502, %v506
        %v510 = vsel %vm433, %v457, 0
        %v513 = vsel %vm433, %v496, 0
        %v516 = vsel %vm433, %v497, 0
        %518 = vmatprep.subr.mxu0 0.0
        %519 = vmatpush1.msra.mxu0 %v498
        %520 = vmatprep.subr.mxu0 0.0
        %521 = vmatpush1.msra.mxu0 %v499
        %522 = vmatprep.subr.mxu0 0.0
        %523 = vmatpush1.msra.mxu0 %v500
        %524 = vmatprep.subr.mxu0 0.0
        %525 = vmatpush1.msra.mxu0 %v501
        %526 = vmatprep.subr.mxu0 0.0
        %527 = vmatpush1.msra.mxu0 0.0
        %528 = vmatprep.subr.mxu0 0.0
        %529 = vmatpush1.msra.mxu0 0.0
        %530 = vmatprep.subr.mxu0 0.0
        %531 = vmatpush1.msra.mxu0 0.0
        %532 = vmatprep.subr.mxu0 0.0
        %533 = vmatpush1.msra.mxu0 0.0
        %534 = vmatprep.subr.mxu0 0.0
        %535 = vmatpush1.msra.mxu0 0.0
        %536 = vmatprep.subr.mxu0 0.0
        %537 = vmatpush1.msra.mxu0 0.0
        %538 = vmatprep.subr.mxu0 0.0
        %539 = vmatpush1.msra.mxu0 0.0
        %540 = vmatprep.subr.mxu0 0.0
        %541 = vmatpush1.msra.mxu0 0.0
        %542 = vmatprep.subr.mxu0 0.0
        %543 = vmatpush1.msra.mxu0 0.0
        %544 = vmatprep.subr.mxu0 0.0
        %545 = vmatpush1.msra.mxu0 0.0
        %546 = vmatprep.subr.mxu0 0.0
        %547 = vmatpush1.msra.mxu0 0.0
        %548 = vmatprep.subr.mxu0 0.0
        %549 = vmatpush1.msra.mxu0 0.0
        %550 = vmatprep.subr.mxu0 0.0
        %551 = vmatpush1.msra.mxu0 0.0
        %552 = vmatprep.subr.mxu0 0.0
        %553 = vmatpush1.msra.mxu0 0.0
        %554 = vmatprep.subr.mxu0 0.0
        %555 = vmatpush1.msra.mxu0 0.0
        %556 = vmatprep.subr.mxu0 0.0
        %557 = vmatpush1.msra.mxu0 0.0
        %558 = vmatprep.subr.mxu0 0.0
        %559 = vmatpush1.msra.mxu0 0.0
        %560 = vmatprep.subr.mxu0 0.0
        %561 = vmatpush1.msra.mxu0 0.0
        %562 = vmatprep.subr.mxu0 0.0
        %563 = vmatpush1.msra.mxu0 0.0
        %564 = vmatprep.subr.mxu0 0.0
        %565 = vmatpush1.msra.mxu0 0.0
        %566 = vmatprep.subr.mxu0 0.0
        %567 = vmatpush1.msra.mxu0 0.0
        %568 = vmatprep.subr.mxu0 0.0
        %569 = vmatpush1.msra.mxu0 0.0
        %570 = vmatprep.subr.mxu0 0.0
        %571 = vmatpush1.msra.mxu0 0.0
        %572 = vmatprep.subr.mxu0 0.0
        %573 = vmatpush1.msra.mxu0 0.0
        %574 = vmatprep.subr.mxu0 0.0
        %575 = vmatpush1.msra.mxu0 0.0
        %576 = vmatprep.subr.mxu0 0.0
        %577 = vmatpush1.msra.mxu0 0.0
        %578 = vmatprep.subr.mxu0 0.0
        %579 = vmatpush1.msra.mxu0 0.0
        %580 = vmatprep.subr.mxu0 0.0
        %581 = vmatpush1.msra.mxu0 0.0
        %582 = vmatprep.mubr.f32.mxu0 0.0
        %583 = vmatmul.mubr.f32.gmra.mrb[0].mxu0 %v510
        %v584 = vpop.f32.mrb[0].mxu0
        %v585 = vadd.f32 %v507, %v584
        %v586 = vpop.f32.mrb[0].mxu0
        %587 = vmatprep.mubr.f32.mxu0 0.0
        %588 = vmatmul.mubr.f32.gmra.mrb[0].mxu0 %v513
        %v589 = vpop.f32.mrb[0].mxu0
        %v590 = vadd.f32 %v507, %v589
        %v591 = vpop.f32.mrb[0].mxu0
        %592 = vmatprep.mubr.f32.mxu0 0.0
        %593 = vmatmul.mubr.f32.gmra.mrb[0].mxu0 %v516
        %v594 = vpop.f32.mrb[0].mxu0
        %v595 = vadd.f32 %v507, %v594
        %v596 = vpop.f32.mrb[0].mxu0
        %597 = vdwg.mxu0
        %v598 = vld [vmem:[%s9] sm:$0xff]
        %v599 = vld [vmem:[%s9 + $0x8] sm:$0xff]
        %v600 = vld [vmem:[%s9 + $0x10] sm:$0xff]
        %v601 = vld [vmem:[%s9 + $0x18] sm:$0xff]
        %v602 = vld [vmem:[%s9 + $0x20] sm:$0xff]
        %v603 = vld [vmem:[%s9 + $0x28] sm:$0xff]
        %v604 = vld [vmem:[%s9 + $0x30] sm:$0xff]
        %v605 = vld [vmem:[%s9 + $0x38] sm:$0xff]
        %614 = vrot.lane.b32.xlu0 %v598, 32
        %v615 = vpop.permute.xlu0 %614
        %616 = vrot.lane.b32.xlu0 %v599, 32
        %v617 = vpop.permute.xlu0 %616
        %618 = vrot.lane.b32.xlu0 %v600, 32
        %v619 = vpop.permute.xlu0 %618
        %620 = vrot.lane.b32.xlu0 %v601, 32
        %v621 = vpop.permute.xlu0 %620
        %622 = vrot.lane.b32.xlu0 %v602, 32
        %v623 = vpop.permute.xlu0 %622
        %624 = vrot.lane.b32.xlu0 %v603, 32
        %v625 = vpop.permute.xlu0 %624
        %626 = vrot.lane.b32.xlu0 %v604, 32
        %v627 = vpop.permute.xlu0 %626
        %628 = vrot.lane.b32.xlu0 %v605, 32
        %v629 = vpop.permute.xlu0 %628
        %v638 = vmul.f32 %v590, %v615
        %v639 = vmul.f32 %v595, %v617
        %v640 = vmul.f32 %v590, %v619
        %v641 = vmul.f32 %v595, %v621
        %v642 = vmul.f32 %v590, %v623
        %v643 = vmul.f32 %v595, %v625
        %v644 = vmul.f32 %v590, %v627
        %v645 = vmul.f32 %v595, %v629
        %646 = vrot.lane.b32.xlu0 %v598, 64
        %v647 = vpop.permute.xlu0 %646
        %648 = vrot.lane.b32.xlu0 %v599, 64
        %v649 = vpop.permute.xlu0 %648
        %650 = vrot.lane.b32.xlu0 %v600, 64
        %v651 = vpop.permute.xlu0 %650
        %652 = vrot.lane.b32.xlu0 %v601, 64
        %v653 = vpop.permute.xlu0 %652
        %654 = vrot.lane.b32.xlu0 %v602, 64
        %v655 = vpop.permute.xlu0 %654
        %656 = vrot.lane.b32.xlu0 %v603, 64
        %v657 = vpop.permute.xlu0 %656
        %658 = vrot.lane.b32.xlu0 %v604, 64
        %v659 = vpop.permute.xlu0 %658
        %660 = vrot.lane.b32.xlu0 %v605, 64
        %v661 = vpop.permute.xlu0 %660
        %v670 = vmul.f32 %v590, %v647
        %v671 = vmul.f32 %v595, %v649
        %v672 = vmul.f32 %v590, %v651
        %v673 = vmul.f32 %v595, %v653
        %v674 = vmul.f32 %v590, %v655
        %v675 = vmul.f32 %v595, %v657
        %v676 = vmul.f32 %v590, %v659
        %v677 = vmul.f32 %v595, %v661
        %686 = vrot.lane.b32.xlu0 %v638, 96
        %v687 = vpop.permute.xlu0 %686
        %688 = vrot.lane.b32.xlu0 %v639, 96
        %v689 = vpop.permute.xlu0 %688
        %690 = vrot.lane.b32.xlu0 %v640, 96
        %v691 = vpop.permute.xlu0 %690
        %692 = vrot.lane.b32.xlu0 %v641, 96
        %v693 = vpop.permute.xlu0 %692
        %694 = vrot.lane.b32.xlu0 %v642, 96
        %v695 = vpop.permute.xlu0 %694
        %696 = vrot.lane.b32.xlu0 %v643, 96
        %v697 = vpop.permute.xlu0 %696
        %698 = vrot.lane.b32.xlu0 %v644, 96
        %v699 = vpop.permute.xlu0 %698
        %700 = vrot.lane.b32.xlu0 %v645, 96
        %v701 = vpop.permute.xlu0 %700
        %v703 = vsel %vm433, %v585, 0
        %v705 = vsel %vm433, %v687, 0
        %v707 = vsel %vm433, %v689, 0
        %v709 = vsel %vm433, %v691, 0
        %v711 = vsel %vm433, %v693, 0
        %v713 = vsel %vm433, %v695, 0
        %v715 = vsel %vm433, %v697, 0
        %v717 = vsel %vm433, %v699, 0
        %v719 = vsel %vm433, %v701, 0
        %721 = vmatprep.subr.mxu0 0.0
        %722 = vmatpush1.xpose.msra.mxu0 %v705
        %723 = vmatprep.subr.mxu0 0.0
        %724 = vmatpush1.xpose.msra.mxu0 %v707
        %725 = vmatprep.subr.mxu0 0.0
        %726 = vmatpush1.xpose.msra.mxu0 %v709
        %727 = vmatprep.subr.mxu0 0.0
        %728 = vmatpush1.xpose.msra.mxu0 %v711
        %729 = vmatprep.subr.mxu0 0.0
        %730 = vmatpush1.xpose.msra.mxu0 %v713
        %731 = vmatprep.subr.mxu0 0.0
        %732 = vmatpush1.xpose.msra.mxu0 %v715
        %733 = vmatprep.subr.mxu0 0.0
        %734 = vmatpush1.xpose.msra.mxu0 %v717
        %735 = vmatprep.subr.mxu0 0.0
        %736 = vmatpush1.xpose.msra.mxu0 %v719
        %737 = vmatprep.subr.mxu0 0.0
        %738 = vmatpush1.xpose.msra.mxu0 0.0
        %739 = vmatprep.subr.mxu0 0.0
        %740 = vmatpush1.xpose.msra.mxu0 0.0
        %741 = vmatprep.subr.mxu0 0.0
        %742 = vmatpush1.xpose.msra.mxu0 0.0
        %743 = vmatprep.subr.mxu0 0.0
        %744 = vmatpush1.xpose.msra.mxu0 0.0
        %745 = vmatprep.subr.mxu0 0.0
        %746 = vmatpush1.xpose.msra.mxu0 0.0
        %747 = vmatprep.subr.mxu0 0.0
        %748 = vmatpush1.xpose.msra.mxu0 0.0
        %749 = vmatprep.subr.mxu0 0.0
        %750 = vmatpush1.xpose.msra.mxu0 0.0
        %751 = vmatprep.subr.mxu0 0.0
        %752 = vmatpush1.xpose.msra.mxu0 0.0
        %753 = vmatprep.subr.mxu0 0.0
        %754 = vmatpush1.xpose.msra.mxu0 0.0
        %755 = vmatprep.subr.mxu0 0.0
        %756 = vmatpush1.xpose.msra.mxu0 0.0
        %757 = vmatprep.subr.mxu0 0.0
        %758 = vmatpush1.xpose.msra.mxu0 0.0
        %759 = vmatprep.subr.mxu0 0.0
        %760 = vmatpush1.xpose.msra.mxu0 0.0
        %761 = vmatprep.subr.mxu0 0.0
        %762 = vmatpush1.xpose.msra.mxu0 0.0
        %763 = vmatprep.subr.mxu0 0.0
        %764 = vmatpush1.xpose.msra.mxu0 0.0
        %765 = vmatprep.subr.mxu0 0.0
        %766 = vmatpush1.xpose.msra.mxu0 0.0
        %767 = vmatprep.subr.mxu0 0.0
        %768 = vmatpush1.xpose.msra.mxu0 0.0
        %769 = vmatprep.subr.mxu0 0.0
        %770 = vmatpush1.xpose.msra.mxu0 0.0
        %771 = vmatprep.subr.mxu0 0.0
        %772 = vmatpush1.xpose.msra.mxu0 0.0
        %773 = vmatprep.subr.mxu0 0.0
        %774 = vmatpush1.xpose.msra.mxu0 0.0
        %775 = vmatprep.subr.mxu0 0.0
        %776 = vmatpush1.xpose.msra.mxu0 0.0
        %777 = vmatprep.subr.mxu0 0.0
        %778 = vmatpush1.xpose.msra.mxu0 0.0
        %779 = vmatprep.subr.mxu0 0.0
        %780 = vmatpush1.xpose.msra.mxu0 0.0
        %781 = vmatprep.subr.mxu0 0.0
        %782 = vmatpush1.xpose.msra.mxu0 0.0
        %783 = vmatprep.subr.mxu0 0.0
        %784 = vmatpush1.xpose.msra.mxu0 0.0
        %785 = vmatprep.mubr.f32.mxu0 0.0
        %786 = vmatmul.mubr.f32.gmra.mrb[0].mxu0 %v703
        %v787 = vpop.f32.mrb[0].mxu0
        %v788 = vadd.f32 0.0, %v787
        %v789 = vpop.f32.mrb[0].mxu0
        %790 = vdwg.mxu0
        %v791 = vmul.f32 %v788, 0.35355338
        %v792 = vld [vmem:[%s11] sm:$0xff]
        %v793 = vadd.f32 %v791, %v792
        %vm794 = vcmask 523264
        %v795 = vsel %vm794, %v793, -inf
        %796 = vmax.xlane.f32.xlu0 %v795
        %v797 = vpop.xlane.xlu0 %796
        %v798 = vsub.f32 %v793, %v797
        %v799 = vmul.f32 %v798, 1.442695
        %v800 = vpow.pop %v799
        %v801 = vld [vmem:[%s10] sm:$0xff]
        %v802 = vld [vmem:[%s10 + $0x8] sm:$0xff]
        %v803 = vld [vmem:[%s10 + $0x10] sm:$0xff]
        %v804 = vld [vmem:[%s10 + $0x18] sm:$0xff]
        %v805 = vld [vmem:[%s10 + $0x20] sm:$0xff]
        %v806 = vld [vmem:[%s10 + $0x28] sm:$0xff]
        %v807 = vld [vmem:[%s10 + $0x30] sm:$0xff]
        %v808 = vld [vmem:[%s10 + $0x38] sm:$0xff]
        %v810 = vsel %vm794, %v800, 0
        %812 = vmatprep.subr.mxu0 0.0
        %813 = vmatpush1.msra.mxu0 %v801
        %814 = vmatprep.subr.mxu0 0.0
        %815 = vmatpush1.msra.mxu0 %v802
        %816 = vmatprep.subr.mxu0 0.0
        %817 = vmatpush1.msra.mxu0 %v803
        %818 = vmatprep.subr.mxu0 0.0
        %819 = vmatpush1.msra.mxu0 %v804
        %820 = vmatprep.subr.mxu0 0.0
        %821 = vmatpush1.msra.mxu0 %v805
        %822 = vmatprep.subr.mxu0 0.0
        %823 = vmatpush1.msra.mxu0 %v806
        %824 = vmatprep.subr.mxu0 0.0
        %825 = vmatpush1.msra.mxu0 %v807
        %826 = vmatprep.subr.mxu0 0.0
        %827 = vmatpush1.msra.mxu0 %v808
        %828 = vmatprep.subr.mxu0 0.0
        %829 = vmatpush1.msra.mxu0 0.0
        %830 = vmatprep.subr.mxu0 0.0
        %831 = vmatpush1.msra.mxu0 0.0
        %832 = vmatprep.subr.mxu0 0.0
        %833 = vmatpush1.msra.mxu0 0.0
        %834 = vmatprep.subr.mxu0 0.0
        %835 = vmatpush1.msra.mxu0 0.0
        %836 = vmatprep.subr.mxu0 0.0
        %837 = vmatpush1.msra.mxu0 0.0
        %838 = vmatprep.subr.mxu0 0.0
        %839 = vmatpush1.msra.mxu0 0.0
        %840 = vmatprep.subr.mxu0 0.0
        %841 = vmatpush1.msra.mxu0 0.0
        %842 = vmatprep.subr.mxu0 0.0
        %843 = vmatpush1.msra.mxu0 0.0
        %844 = vmatprep.subr.mxu0 0.0
        %845 = vmatpush1.msra.mxu0 0.0
        %846 = vmatprep.subr.mxu0 0.0
        %847 = vmatpush1.msra.mxu0 0.0
        %848 = vmatprep.subr.mxu0 0.0
        %849 = vmatpush1.msra.mxu0 0.0
        %850 = vmatprep.subr.mxu0 0.0
        %851 = vmatpush1.msra.mxu0 0.0
        %852 = vmatprep.subr.mxu0 0.0
        %853 = vmatpush1.msra.mxu0 0.0
        %854 = vmatprep.subr.mxu0 0.0
        %855 = vmatpush1.msra.mxu0 0.0
        %856 = vmatprep.subr.mxu0 0.0
        %857 = vmatpush1.msra.mxu0 0.0
        %858 = vmatprep.subr.mxu0 0.0
        %859 = vmatpush1.msra.mxu0 0.0
        %860 = vmatprep.subr.mxu0 0.0
        %861 = vmatpush1.msra.mxu0 0.0
        %862 = vmatprep.subr.mxu0 0.0
        %863 = vmatpush1.msra.mxu0 0.0
        %864 = vmatprep.subr.mxu0 0.0
        %865 = vmatpush1.msra.mxu0 0.0
        %866 = vmatprep.subr.mxu0 0.0
        %867 = vmatpush1.msra.mxu0 0.0
        %868 = vmatprep.subr.mxu0 0.0
        %869 = vmatpush1.msra.mxu0 0.0
        %870 = vmatprep.subr.mxu0 0.0
        %871 = vmatpush1.msra.mxu0 0.0
        %872 = vmatprep.subr.mxu0 0.0
        %873 = vmatpush1.msra.mxu0 0.0
        %874 = vmatprep.subr.mxu0 0.0
        %875 = vmatpush1.msra.mxu0 0.0
        %876 = vmatprep.mubr.f32.mxu0 0.0
        %877 = vmatmul.mubr.f32.gmra.mrb[0].mxu0 %v810
        %v878 = vpop.f32.mrb[0].mxu0
        %v879 = vadd.f32 0.0, %v878
        %v880 = vpop.f32.mrb[0].mxu0
        %881 = vdwg.mxu0
        %v882 = vmax.f32 %v879, 1e-30
        %v883 = vrcp.pop %v882
        %v884 = vmul.f32 %v800, %v883
        %893 = vrot.lane.b32.xlu0 %v670, 64
        %v894 = vpop.permute.xlu0 %893
        %895 = vrot.lane.b32.xlu0 %v671, 64
        %v896 = vpop.permute.xlu0 %895
        %897 = vrot.lane.b32.xlu0 %v672, 64
        %v898 = vpop.permute.xlu0 %897
        %899 = vrot.lane.b32.xlu0 %v673, 64
        %v900 = vpop.permute.xlu0 %899
        %901 = vrot.lane.b32.xlu0 %v674, 64
        %v902 = vpop.permute.xlu0 %901
        %903 = vrot.lane.b32.xlu0 %v675, 64
        %v904 = vpop.permute.xlu0 %903
        %905 = vrot.lane.b32.xlu0 %v676, 64
        %v906 = vpop.permute.xlu0 %905
        %907 = vrot.lane.b32.xlu0 %v677, 64
        %v908 = vpop.permute.xlu0 %907
        %v918 = vsel %vm794, %v884, 0
        %920 = vmatprep.subr.mxu0 0.0
        %921 = vmatpush1.msra.mxu0 %v894
        %922 = vmatprep.subr.mxu0 0.0
        %923 = vmatpush1.msra.mxu0 %v896
        %924 = vmatprep.subr.mxu0 0.0
        %925 = vmatpush1.msra.mxu0 %v898
        %926 = vmatprep.subr.mxu0 0.0
        %927 = vmatpush1.msra.mxu0 %v900
        %928 = vmatprep.subr.mxu0 0.0
        %929 = vmatpush1.msra.mxu0 %v902
        %930 = vmatprep.subr.mxu0 0.0
        %931 = vmatpush1.msra.mxu0 %v904
        %932 = vmatprep.subr.mxu0 0.0
        %933 = vmatpush1.msra.mxu0 %v906
        %934 = vmatprep.subr.mxu0 0.0
        %935 = vmatpush1.msra.mxu0 %v908
        %936 = vmatprep.subr.mxu0 0.0
        %937 = vmatpush1.msra.mxu0 0.0
        %938 = vmatprep.subr.mxu0 0.0
        %939 = vmatpush1.msra.mxu0 0.0
        %940 = vmatprep.subr.mxu0 0.0
        %941 = vmatpush1.msra.mxu0 0.0
        %942 = vmatprep.subr.mxu0 0.0
        %943 = vmatpush1.msra.mxu0 0.0
        %944 = vmatprep.subr.mxu0 0.0
        %945 = vmatpush1.msra.mxu0 0.0
        %946 = vmatprep.subr.mxu0 0.0
        %947 = vmatpush1.msra.mxu0 0.0
        %948 = vmatprep.subr.mxu0 0.0
        %949 = vmatpush1.msra.mxu0 0.0
        %950 = vmatprep.subr.mxu0 0.0
        %951 = vmatpush1.msra.mxu0 0.0
        %952 = vmatprep.subr.mxu0 0.0
        %953 = vmatpush1.msra.mxu0 0.0
        %954 = vmatprep.subr.mxu0 0.0
        %955 = vmatpush1.msra.mxu0 0.0
        %956 = vmatprep.subr.mxu0 0.0
        %957 = vmatpush1.msra.mxu0 0.0
        %958 = vmatprep.subr.mxu0 0.0
        %959 = vmatpush1.msra.mxu0 0.0
        %960 = vmatprep.subr.mxu0 0.0
        %961 = vmatpush1.msra.mxu0 0.0
        %962 = vmatprep.subr.mxu0 0.0
        %963 = vmatpush1.msra.mxu0 0.0
        %964 = vmatprep.subr.mxu0 0.0
        %965 = vmatpush1.msra.mxu0 0.0
        %966 = vmatprep.subr.mxu0 0.0
        %967 = vmatpush1.msra.mxu0 0.0
        %968 = vmatprep.subr.mxu0 0.0
        %969 = vmatpush1.msra.mxu0 0.0
        %970 = vmatprep.subr.mxu0 0.0
        %971 = vmatpush1.msra.mxu0 0.0
        %972 = vmatprep.subr.mxu0 0.0
        %973 = vmatpush1.msra.mxu0 0.0
        %974 = vmatprep.subr.mxu0 0.0
        %975 = vmatpush1.msra.mxu0 0.0
        %976 = vmatprep.subr.mxu0 0.0
        %977 = vmatpush1.msra.mxu0 0.0
        %978 = vmatprep.subr.mxu0 0.0
        %979 = vmatpush1.msra.mxu0 0.0
        %980 = vmatprep.subr.mxu0 0.0
        %981 = vmatpush1.msra.mxu0 0.0
        %982 = vmatprep.subr.mxu0 0.0
        %983 = vmatpush1.msra.mxu0 0.0
        %984 = vmatprep.mubr.f32.mxu0 0.0
        %985 = vmatmul.mubr.f32.gmra.mrb[0].mxu0 %v918
        %v986 = vpop.f32.mrb[0].mxu0
        %v987 = vadd.f32 0.0, %v986
        %v988 = vpop.f32.mrb[0].mxu0
        %989 = vdwg.mxu0
        %v990 = vld [vmem:[%s5] sm:$0xff]
        %v991 = vld [vmem:[%s5 + $0x8] sm:$0xff]
        %v992 = vld [vmem:[%s5 + $0x10] sm:$0xff]
        %v993 = vld [vmem:[%s5 + $0x18] sm:$0xff]
        %v995 = vsel %vm433, %v987, 0
        %997 = vmatprep.subr.mxu0 0.0
        %998 = vmatpush1.msra.mxu0 %v990
        %999 = vmatprep.subr.mxu0 0.0
        %1000 = vmatpush1.msra.mxu0 %v991
        %1001 = vmatprep.subr.mxu0 0.0
        %1002 = vmatpush1.msra.mxu0 %v992
        %1003 = vmatprep.subr.mxu0 0.0
        %1004 = vmatpush1.msra.mxu0 %v993
        %1005 = vmatprep.subr.mxu0 0.0
        %1006 = vmatpush1.msra.mxu0 0.0
        %1007 = vmatprep.subr.mxu0 0.0
        %1008 = vmatpush1.msra.mxu0 0.0
        %1009 = vmatprep.subr.mxu0 0.0
        %1010 = vmatpush1.msra.mxu0 0.0
        %1011 = vmatprep.subr.mxu0 0.0
        %1012 = vmatpush1.msra.mxu0 0.0
        %1013 = vmatprep.subr.mxu0 0.0
        %1014 = vmatpush1.msra.mxu0 0.0
        %1015 = vmatprep.subr.mxu0 0.0
        %1016 = vmatpush1.msra.mxu0 0.0
        %1017 = vmatprep.subr.mxu0 0.0
        %1018 = vmatpush1.msra.mxu0 0.0
        %1019 = vmatprep.subr.mxu0 0.0
        %1020 = vmatpush1.msra.mxu0 0.0
        %1021 = vmatprep.subr.mxu0 0.0
        %1022 = vmatpush1.msra.mxu0 0.0
        %1023 = vmatprep.subr.mxu0 0.0
        %1024 = vmatpush1.msra.mxu0 0.0
        %1025 = vmatprep.subr.mxu0 0.0
        %1026 = vmatpush1.msra.mxu0 0.0
        %1027 = vmatprep.subr.mxu0 0.0
        %1028 = vmatpush1.msra.mxu0 0.0
        %1029 = vmatprep.subr.mxu0 0.0
        %1030 = vmatpush1.msra.mxu0 0.0
        %1031 = vmatprep.subr.mxu0 0.0
        %1032 = vmatpush1.msra.mxu0 0.0
        %1033 = vmatprep.subr.mxu0 0.0
        %1034 = vmatpush1.msra.mxu0 0.0
        %1035 = vmatprep.subr.mxu0 0.0
        %1036 = vmatpush1.msra.mxu0 0.0
        %1037 = vmatprep.subr.mxu0 0.0
        %1038 = vmatpush1.msra.mxu0 0.0
        %1039 = vmatprep.subr.mxu0 0.0
        %1040 = vmatpush1.msra.mxu0 0.0
        %1041 = vmatprep.subr.mxu0 0.0
        %1042 = vmatpush1.msra.mxu0 0.0
        %1043 = vmatprep.subr.mxu0 0.0
        %1044 = vmatpush1.msra.mxu0 0.0
        %1045 = vmatprep.subr.mxu0 0.0
        %1046 = vmatpush1.msra.mxu0 0.0
        %1047 = vmatprep.subr.mxu0 0.0
        %1048 = vmatpush1.msra.mxu0 0.0
        %1049 = vmatprep.subr.mxu0 0.0
        %1050 = vmatpush1.msra.mxu0 0.0
        %1051 = vmatprep.subr.mxu0 0.0
        %1052 = vmatpush1.msra.mxu0 0.0
        %1053 = vmatprep.subr.mxu0 0.0
        %1054 = vmatpush1.msra.mxu0 0.0
        %1055 = vmatprep.subr.mxu0 0.0
        %1056 = vmatpush1.msra.mxu0 0.0
        %1057 = vmatprep.subr.mxu0 0.0
        %1058 = vmatpush1.msra.mxu0 0.0
        %1059 = vmatprep.subr.mxu0 0.0
        %1060 = vmatpush1.msra.mxu0 0.0
        %1061 = vmatprep.mubr.f32.mxu0 0.0
        %1062 = vmatmul.mubr.f32.gmra.mrb[0].mxu0 %v995
        %v1063 = vpop.f32.mrb[0].mxu0
        %v1064 = vadd.f32 0.0, %v1063
        %v1065 = vpop.f32.mrb[0].mxu0
        %1066 = vdwg.mxu0
        %v1067 = vadd.f32 %v457, %v1064
        %v1068 = vlaneseq
        %v1069 = vshrl.u32 %v1068, 7
        %v1070 = vsub.s32 4, %v1069
        %v1071 = vrot.slane %v431, %v1070
        %v1072 = vadd.f32 %v1067, %v1071
        %v1073 = vsel %vm433, %v1072, 0.0
        %1074 = vadd.xlane.f32.xlu0 %v1073
        %v1075 = vpop.xlane.xlu0 %1074
        %v1076 = vmul.f32 %v1075, %v437
        %v1077 = vsub.f32 %v1072, %v1076
        %v1078 = vmul.f32 %v1077, %v1077
        %v1079 = vsel %vm433, %v1078, 0.0
        %1080 = vadd.xlane.f32.xlu0 %v1079
        %v1081 = vpop.xlane.xlu0 %1080
        %v1082 = vmul.f32 %v1081, %v437
        %v1083 = vadd.f32 %v1082, 1e-05
        %v1084 = vrsqrt.pop %v1083
        %v1085 = vmul.f32 %v1077, %v1084
        %v1086 = vld [vmem:[%s6] sm:$0xff]
        %v1087 = vld [vmem:[%s6 + $0x8] sm:$0xff]
        %v1088 = vld [vmem:[%s6 + $0x10] sm:$0xff]
        %v1089 = vld [vmem:[%s6 + $0x18] sm:$0xff]
        %v1090 = vld [vmem:[%s6 + $0x20] sm:$0xff]
        %v1091 = vld [vmem:[%s6 + $0x28] sm:$0xff]
        %v1092 = vld [vmem:[%s6 + $0x30] sm:$0xff]
        %v1093 = vld [vmem:[%s6 + $0x38] sm:$0xff]
        %v1094 = vld [vmem:[%s6 + $0x40] sm:$0xff]
        %v1095 = vld [vmem:[%s6 + $0x48] sm:$0xff]
        %v1096 = vld [vmem:[%s6 + $0x50] sm:$0xff]
        %v1097 = vld [vmem:[%s6 + $0x58] sm:$0xff]
        %v1098 = vld [vmem:[%s6 + $0x60] sm:$0xff]
        %v1099 = vld [vmem:[%s6 + $0x68] sm:$0xff]
        %v1100 = vld [vmem:[%s6 + $0x70] sm:$0xff]
        %v1101 = vld [vmem:[%s6 + $0x78] sm:$0xff]
        %v1102 = vld [vmem:[%s7] sm:$0xf]
        %v1104 = vlaneseq
        %v1105 = vshrl.u32 %v1104, 7
        %v1106 = vsub.s32 0, %v1105
        %v1107 = vrot.slane %v1102, %v1106
        %v1108 = vlaneseq
        %v1109 = vshrl.u32 %v1108, 7
        %v1110 = vsub.s32 1, %v1109
        %v1111 = vrot.slane %v1102, %v1110
        %v1112 = vlaneseq
        %v1113 = vshrl.u32 %v1112, 7
        %v1114 = vsub.s32 2, %v1113
        %v1115 = vrot.slane %v1102, %v1114
        %v1116 = vlaneseq
        %v1117 = vshrl.u32 %v1116, 7
        %v1118 = vsub.s32 3, %v1117
        %v1119 = vrot.slane %v1102, %v1118
        %v1125 = vsel %vm433, %v1085, 0
        %1127 = vmatprep.subr.mxu0 %v1087
        %1128 = vmatpush1.msra.mxu0 %v1086
        %1129 = vmatprep.subr.mxu0 %v1091
        %1130 = vmatpush1.msra.mxu0 %v1090
        %1131 = vmatprep.subr.mxu0 %v1095
        %1132 = vmatpush1.msra.mxu0 %v1094
        %1133 = vmatprep.subr.mxu0 %v1099
        %1134 = vmatpush1.msra.mxu0 %v1098
        %1135 = vmatprep.subr.mxu0 0.0
        %1136 = vmatpush1.msra.mxu0 0.0
        %1137 = vmatprep.subr.mxu0 0.0
        %1138 = vmatpush1.msra.mxu0 0.0
        %1139 = vmatprep.subr.mxu0 0.0
        %1140 = vmatpush1.msra.mxu0 0.0
        %1141 = vmatprep.subr.mxu0 0.0
        %1142 = vmatpush1.msra.mxu0 0.0
        %1143 = vmatprep.subr.mxu0 0.0
        %1144 = vmatpush1.msra.mxu0 0.0
        %1145 = vmatprep.subr.mxu0 0.0
        %1146 = vmatpush1.msra.mxu0 0.0
        %1147 = vmatprep.subr.mxu0 0.0
        %1148 = vmatpush1.msra.mxu0 0.0
        %1149 = vmatprep.subr.mxu0 0.0
        %1150 = vmatpush1.msra.mxu0 0.0
        %1151 = vmatprep.subr.mxu0 0.0
        %1152 = vmatpush1.msra.mxu0 0.0
        %1153 = vmatprep.subr.mxu0 0.0
        %1154 = vmatpush1.msra.mxu0 0.0
        %1155 = vmatprep.subr.mxu0 0.0
        %1156 = vmatpush1.msra.mxu0 0.0
        %1157 = vmatprep.subr.mxu0 0.0
        %1158 = vmatpush1.msra.mxu0 0.0
        %1159 = vmatprep.subr.mxu0 0.0
        %1160 = vmatpush1.msra.mxu0 0.0
        %1161 = vmatprep.subr.mxu0 0.0
        %1162 = vmatpush1.msra.mxu0 0.0
        %1163 = vmatprep.subr.mxu0 0.0
        %1164 = vmatpush1.msra.mxu0 0.0
        %1165 = vmatprep.subr.mxu0 0.0
        %1166 = vmatpush1.msra.mxu0 0.0
        %1167 = vmatprep.subr.mxu0 0.0
        %1168 = vmatpush1.msra.mxu0 0.0
        %1169 = vmatprep.subr.mxu0 0.0
        %1170 = vmatpush1.msra.mxu0 0.0
        %1171 = vmatprep.subr.mxu0 0.0
        %1172 = vmatpush1.msra.mxu0 0.0
        %1173 = vmatprep.subr.mxu0 0.0
        %1174 = vmatpush1.msra.mxu0 0.0
        %1175 = vmatprep.subr.mxu0 0.0
        %1176 = vmatpush1.msra.mxu0 0.0
        %1177 = vmatprep.subr.mxu0 0.0
        %1178 = vmatpush1.msra.mxu0 0.0
        %1179 = vmatprep.subr.mxu0 0.0
        %1180 = vmatpush1.msra.mxu0 0.0
        %1181 = vmatprep.subr.mxu0 0.0
        %1182 = vmatpush1.msra.mxu0 0.0
        %1183 = vmatprep.subr.mxu0 0.0
        %1184 = vmatpush1.msra.mxu0 0.0
        %1185 = vmatprep.subr.mxu0 0.0
        %1186 = vmatpush1.msra.mxu0 0.0
        %1187 = vmatprep.subr.mxu0 0.0
        %1188 = vmatpush1.msra.mxu0 0.0
        %1189 = vmatprep.subr.mxu0 0.0
        %1190 = vmatpush1.msra.mxu0 0.0
        %1191 = vmatprep.mubr.f32.mxu0 0.0
        %1192 = vmatmul.mubr.f32.gmra.mrb[0].mxu0 %v1125
        %v1193 = vpop.f32.mrb[0].mxu0
        %v1194 = vadd.f32 %v1107, %v1193
        %v1195 = vpop.f32.mrb[0].mxu0
        %v1196 = vadd.f32 %v1111, %v1195
        %1197 = vdwg.mxu0
        %1198 = vmatprep.subr.mxu0 %v1089
        %1199 = vmatpush1.msra.mxu0 %v1088
        %1200 = vmatprep.subr.mxu0 %v1093
        %1201 = vmatpush1.msra.mxu0 %v1092
        %1202 = vmatprep.subr.mxu0 %v1097
        %1203 = vmatpush1.msra.mxu0 %v1096
        %1204 = vmatprep.subr.mxu0 %v1101
        %1205 = vmatpush1.msra.mxu0 %v1100
        %1206 = vmatprep.subr.mxu0 0.0
        %1207 = vmatpush1.msra.mxu0 0.0
        %1208 = vmatprep.subr.mxu0 0.0
        %1209 = vmatpush1.msra.mxu0 0.0
        %1210 = vmatprep.subr.mxu0 0.0
        %1211 = vmatpush1.msra.mxu0 0.0
        %1212 = vmatprep.subr.mxu0 0.0
        %1213 = vmatpush1.msra.mxu0 0.0
        %1214 = vmatprep.subr.mxu0 0.0
        %1215 = vmatpush1.msra.mxu0 0.0
        %1216 = vmatprep.subr.mxu0 0.0
        %1217 = vmatpush1.msra.mxu0 0.0
        %1218 = vmatprep.subr.mxu0 0.0
        %1219 = vmatpush1.msra.mxu0 0.0
        %1220 = vmatprep.subr.mxu0 0.0
        %1221 = vmatpush1.msra.mxu0 0.0
        %1222 = vmatprep.subr.mxu0 0.0
        %1223 = vmatpush1.msra.mxu0 0.0
        %1224 = vmatprep.subr.mxu0 0.0
        %1225 = vmatpush1.msra.mxu0 0.0
        %1226 = vmatprep.subr.mxu0 0.0
        %1227 = vmatpush1.msra.mxu0 0.0
        %1228 = vmatprep.subr.mxu0 0.0
        %1229 = vmatpush1.msra.mxu0 0.0
        %1230 = vmatprep.subr.mxu0 0.0
        %1231 = vmatpush1.msra.mxu0 0.0
        %1232 = vmatprep.subr.mxu0 0.0
        %1233 = vmatpush1.msra.mxu0 0.0
        %1234 = vmatprep.subr.mxu0 0.0
        %1235 = vmatpush1.msra.mxu0 0.0
        %1236 = vmatprep.subr.mxu0 0.0
        %1237 = vmatpush1.msra.mxu0 0.0
        %1238 = vmatprep.subr.mxu0 0.0
        %1239 = vmatpush1.msra.mxu0 0.0
        %1240 = vmatprep.subr.mxu0 0.0
        %1241 = vmatpush1.msra.mxu0 0.0
        %1242 = vmatprep.subr.mxu0 0.0
        %1243 = vmatpush1.msra.mxu0 0.0
        %1244 = vmatprep.subr.mxu0 0.0
        %1245 = vmatpush1.msra.mxu0 0.0
        %1246 = vmatprep.subr.mxu0 0.0
        %1247 = vmatpush1.msra.mxu0 0.0
        %1248 = vmatprep.subr.mxu0 0.0
        %1249 = vmatpush1.msra.mxu0 0.0
        %1250 = vmatprep.subr.mxu0 0.0
        %1251 = vmatpush1.msra.mxu0 0.0
        %1252 = vmatprep.subr.mxu0 0.0
        %1253 = vmatpush1.msra.mxu0 0.0
        %1254 = vmatprep.subr.mxu0 0.0
        %1255 = vmatpush1.msra.mxu0 0.0
        %1256 = vmatprep.subr.mxu0 0.0
        %1257 = vmatpush1.msra.mxu0 0.0
        %1258 = vmatprep.subr.mxu0 0.0
        %1259 = vmatpush1.msra.mxu0 0.0
        %1260 = vmatprep.subr.mxu0 0.0
        %1261 = vmatpush1.msra.mxu0 0.0
        %1262 = vmatprep.mubr.f32.mxu0 0.0
        %1263 = vmatmul.mubr.f32.gmra.mrb[0].mxu0 %v1125
        %v1264 = vpop.f32.mrb[0].mxu0
        %v1265 = vadd.f32 %v1115, %v1264
        %v1266 = vpop.f32.mrb[0].mxu0
        %v1267 = vadd.f32 %v1119, %v1266
        %1268 = vdwg.mxu0
        %v1269 = vxor.u32 %v1194, 2147483648
        %v1270 = vxor.u32 %v1196, 2147483648
        %v1271 = vmul.f32 %v1269, 1.442695
        %v1272 = vpow.pop %v1271
        %v1273 = vmul.f32 %v1270, 1.442695
        %v1274 = vpow.pop %v1273
        %v1275 = vadd.f32 %v1272, 1.0
        %v1276 = vadd.f32 %v1274, 1.0
        %v1277 = vrcp.pop %v1275
        %v1278 = vmul.f32 1.0, %v1277
        %v1279 = vrcp.pop %v1276
        %v1280 = vmul.f32 1.0, %v1279
        %v1281 = vmul.f32 %v1194, %v1278
        %v1282 = vmul.f32 %v1196, %v1280
        %v1283 = vmul.f32 %v1281, %v1265
        %v1284 = vmul.f32 %v1282, %v1267
        %v1285 = vadd.f32 %v1283, %v1284
        %1286 = vadd.xlane.f32.xlu0 %v1285
        %v1287 = vpop.xlane.xlu0 %1286
        %v1288 = vrcp.pop 256.0
        %v1289 = vmul.f32 %v1287, %v1288
        %v1290 = vsub.f32 %v1283, %v1289
        %v1291 = vsub.f32 %v1284, %v1289
        %v1292 = vmul.f32 %v1290, %v1290
        %v1293 = vmul.f32 %v1291, %v1291
        %v1294 = vadd.f32 %v1292, %v1293
        %1295 = vadd.xlane.f32.xlu0 %v1294
        %v1296 = vpop.xlane.xlu0 %1295
        %v1297 = vmul.f32 %v1296, %v1288
        %v1298 = vadd.f32 %v1297, 1e-06
        %v1299 = vrsqrt.pop %v1298
        %v1300 = vmul.f32 %v1290, %v1299
        %v1301 = vmul.f32 %v1291, %v1299
        %v1302 = vld [vmem:[%s8] sm:$0xff]
        %v1303 = vld [vmem:[%s8 + $0x8] sm:$0xff]
        %v1304 = vld [vmem:[%s8 + $0x10] sm:$0xff]
        %v1305 = vld [vmem:[%s8 + $0x18] sm:$0xff]
        %v1306 = vld [vmem:[%s8 + $0x20] sm:$0xff]
        %v1307 = vld [vmem:[%s8 + $0x28] sm:$0xff]
        %v1308 = vld [vmem:[%s8 + $0x30] sm:$0xff]
        %v1309 = vld [vmem:[%s8 + $0x38] sm:$0xff]
        %v1310 = vld [vmem:[%s8 + $0x40] sm:$0xff]
        %v1311 = vld [vmem:[%s8 + $0x48] sm:$0xff]
        %v1312 = vld [vmem:[%s8 + $0x50] sm:$0xff]
        %v1313 = vld [vmem:[%s8 + $0x58] sm:$0xff]
        %v1314 = vld [vmem:[%s8 + $0x60] sm:$0xff]
        %v1315 = vld [vmem:[%s8 + $0x68] sm:$0xff]
        %v1316 = vld [vmem:[%s8 + $0x70] sm:$0xff]
        %v1317 = vld [vmem:[%s8 + $0x78] sm:$0xff]
        %v1318 = vld [vmem:[%s8 + $0x80] sm:$0xff]
        %v1319 = vld [vmem:[%s8 + $0x88] sm:$0xff]
        %v1320 = vld [vmem:[%s8 + $0x90] sm:$0xff]
        %v1321 = vld [vmem:[%s8 + $0x98] sm:$0xff]
        %v1322 = vld [vmem:[%s8 + $0xa0] sm:$0xff]
        %v1323 = vld [vmem:[%s8 + $0xa8] sm:$0xff]
        %v1324 = vld [vmem:[%s8 + $0xb0] sm:$0xff]
        %v1325 = vld [vmem:[%s8 + $0xb8] sm:$0xff]
        %v1326 = vld [vmem:[%s8 + $0xc0] sm:$0xff]
        %v1327 = vld [vmem:[%s8 + $0xc8] sm:$0xff]
        %v1328 = vld [vmem:[%s8 + $0xd0] sm:$0xff]
        %v1329 = vld [vmem:[%s8 + $0xd8] sm:$0xff]
        %v1330 = vld [vmem:[%s8 + $0xe0] sm:$0xff]
        %v1331 = vld [vmem:[%s8 + $0xe8] sm:$0xff]
        %v1332 = vld [vmem:[%s8 + $0xf0] sm:$0xff]
        %v1333 = vld [vmem:[%s8 + $0xf8] sm:$0xff]
        %1334 = vmatprep.subr.mxu0 0.0
        %1335 = vmatpush1.msra.mxu0 %v1302
        %1336 = vmatprep.subr.mxu0 0.0
        %1337 = vmatpush1.msra.mxu0 %v1303
        %1338 = vmatprep.subr.mxu0 0.0
        %1339 = vmatpush1.msra.mxu0 %v1304
        %1340 = vmatprep.subr.mxu0 0.0
        %1341 = vmatpush1.msra.mxu0 %v1305
        %1342 = vmatprep.subr.mxu0 0.0
        %1343 = vmatpush1.msra.mxu0 %v1306
        %1344 = vmatprep.subr.mxu0 0.0
        %1345 = vmatpush1.msra.mxu0 %v1307
        %1346 = vmatprep.subr.mxu0 0.0
        %1347 = vmatpush1.msra.mxu0 %v1308
        %1348 = vmatprep.subr.mxu0 0.0
        %1349 = vmatpush1.msra.mxu0 %v1309
        %1350 = vmatprep.subr.mxu0 0.0
        %1351 = vmatpush1.msra.mxu0 %v1310
        %1352 = vmatprep.subr.mxu0 0.0
        %1353 = vmatpush1.msra.mxu0 %v1311
        %1354 = vmatprep.subr.mxu0 0.0
        %1355 = vmatpush1.msra.mxu0 %v1312
        %1356 = vmatprep.subr.mxu0 0.0
        %1357 = vmatpush1.msra.mxu0 %v1313
        %1358 = vmatprep.subr.mxu0 0.0
        %1359 = vmatpush1.msra.mxu0 %v1314
        %1360 = vmatprep.subr.mxu0 0.0
        %1361 = vmatpush1.msra.mxu0 %v1315
        %1362 = vmatprep.subr.mxu0 0.0
        %1363 = vmatpush1.msra.mxu0 %v1316
        %1364 = vmatprep.subr.mxu0 0.0
        %1365 = vmatpush1.msra.mxu0 %v1317
        %1366 = vmatprep.subr.mxu0 0.0
        %1367 = vmatpush1.msra.mxu0 %v1318
        %1368 = vmatprep.subr.mxu0 0.0
        %1369 = vmatpush1.msra.mxu0 %v1319
        %1370 = vmatprep.subr.mxu0 0.0
        %1371 = vmatpush1.msra.mxu0 %v1320
        %1372 = vmatprep.subr.mxu0 0.0
        %1373 = vmatpush1.msra.mxu0 %v1321
        %1374 = vmatprep.subr.mxu0 0.0
        %1375 = vmatpush1.msra.mxu0 %v1322
        %1376 = vmatprep.subr.mxu0 0.0
        %1377 = vmatpush1.msra.mxu0 %v1323
        %1378 = vmatprep.subr.mxu0 0.0
        %1379 = vmatpush1.msra.mxu0 %v1324
        %1380 = vmatprep.subr.mxu0 0.0
        %1381 = vmatpush1.msra.mxu0 %v1325
        %1382 = vmatprep.subr.mxu0 0.0
        %1383 = vmatpush1.msra.mxu0 %v1326
        %1384 = vmatprep.subr.mxu0 0.0
        %1385 = vmatpush1.msra.mxu0 %v1327
        %1386 = vmatprep.subr.mxu0 0.0
        %1387 = vmatpush1.msra.mxu0 %v1328
        %1388 = vmatprep.subr.mxu0 0.0
        %1389 = vmatpush1.msra.mxu0 %v1329
        %1390 = vmatprep.subr.mxu0 0.0
        %1391 = vmatpush1.msra.mxu0 %v1330
        %1392 = vmatprep.subr.mxu0 0.0
        %1393 = vmatpush1.msra.mxu0 %v1331
        %1394 = vmatprep.subr.mxu0 0.0
        %1395 = vmatpush1.msra.mxu0 %v1332
        %1396 = vmatprep.subr.mxu0 0.0
        %1397 = vmatpush1.msra.mxu0 %v1333
        %1398 = vmatprep.mubr.f32.mxu0 %v1301
        %1399 = vmatmul.mubr.f32.gmra.mrb[0].mxu0 %v1300
        %v1400 = vpop.f32.mrb[0].mxu0
        %v1401 = vadd.f32 0.0, %v1400
        %v1402 = vpop.f32.mrb[0].mxu0
        %1403 = vdwg.mxu0
        %v1404 = vadd.f32 %v1072, %v1401
        %v1405 = vlaneseq
        %v1406 = vshrl.u32 %v1405, 7
        %v1407 = vsub.s32 5, %v1406
        %v1408 = vrot.slane %v431, %v1407
        %v1409 = vadd.f32 %v1404, %v1408
        %1410 = vst.msk [vmem:[%s420] sm:$0xff] %vm433, %v1409
        %s1411 = sand.u32 %s296, 1
        %s1412 = scalar_lea.sflag [#allocation3], %s1411
        %s1413 = sand.u32 %s296, 1
        %s1414 = smul.addr %s1413, 8
        %s1415 = scalar_lea.vmem [#allocation2], %s1414
        // Predicated region
        $region69: #{tpu_custom_call.1} parent=67 // pred_check
          %p1416 = pneg %p306
        $region70: #{tpu_custom_call.1} parent=67 // pred_check_branch
          %1418 = sbr.rel (%p1416) target = $region72
        $region71: #{tpu_custom_call.1} parent=67 // pred_region
          %s1420 = ssub.s32 128, 128
          %1421 = vsyncadd %s1412, %s1420
          %s1422 = smul.addr %s26, 128
          %s1423 = scalar_lea.hbm %s12, %s1422
          %s1425 = sshll.u32 %s1415, 4
          %s1426 = int_to_ptr.vmem [resolvable:$true] %s1425
          %1428 = dma.vmem_to_hbm [thread:$0]  %s1426, 128, %s1423, %s1412
        $region72: #{tpu_custom_call.1} parent=67 // pred_fallthru
          _
      $region68: #{tpu_custom_call.1} parent=5 // pred_fallthru
        _
      %p1429 = scmp.le.s32.totalorder 2, %s21
      // Predicated region
      $region73: #{tpu_custom_call.1} parent=5 // pred_check
        %p1430 = pneg %p1429
      $region74: #{tpu_custom_call.1} parent=5 // pred_check_branch
        %1432 = sbr.rel (%p1430) target = $region76
      $region75: #{tpu_custom_call.1} parent=5 // pred_region
        %s1433 = ssub.s32 %s21, 2
        // Predicated region
        $region77: #{tpu_custom_call.1} parent=75 // pred_check
          %p1434 = pneg %p312
        $region78: #{tpu_custom_call.1} parent=75 // pred_check_branch
          %1436 = sbr.rel (%p1434) target = $region80
        $region79: #{tpu_custom_call.1} parent=75 // pred_region
          %s1437 = sand.u32 %s297, 1
          %s1438 = scalar_lea.sflag [#allocation3], %s1437
          %s1439 = sand.u32 %s297, 1
          %s1440 = smul.addr %s1439, 8
          %s1441 = scalar_lea.vmem [#allocation2], %s1440
          %1442 = dma.done %s1438, 128
        $region80: #{tpu_custom_call.1} parent=75 // pred_fallthru
          _
      $region76: #{tpu_custom_call.1} parent=5 // pred_fallthru
        _
    $region6: #{tpu_custom_call.1} parent=1 // loop_footer
      %s25 = sadd.s32 1, %s21
    $region7: #{tpu_custom_call.1} parent=1 // loop_footer_branch
      %20 = sbr.rel target = $region3
    $region8: #{tpu_custom_call.1} parent=1 // loop_exit
      _
    %1443 = vsyncpa [#allocation3], 1
    %s1444 = scalar_lea.sflag [#allocation3], 1
    %1445 = vsyncpa %s1444, 1

</llo_original>
